<compile_context>
chip_gen: v5e
topology: v5e:2x2
jax: 0.10.0
libtpu: 0.0.40
codegen_flags: <defaults>
</compile_context>

<pallas_src>
import math
import numpy as np
import jax
import jax.numpy as jnp
from jax import lax
from jax.experimental import pallas as pl
from jax.experimental.pallas import tpu as pltpu

# ----------------------------- sizes (small demo) -----------------------------
BATCH = 1          # required by the torch code's .view(1, 256)
SEQ = 8            # history length
FEAT = 3           # viewport coordinate dim (Conv1d kernel size 3 over length 3)
CONV_CH = 256      # Conv1d(1, 256, 3)
EMBED = 32         # embed_size (small stand-in for 1024)
FUT = 4            # fut_window_length (small stand-in for 10)
LANE = 128         # TPU lane width; coords / logits are padded to this
QKV_W = LANE + 2 * EMBED               # fused projection width: [v@wot | q | k] = 192
MAX_LEN = ((SEQ + FUT) + 7) // 8 * 8   # padded K/V buffer rows (16)
OUT_ROWS = (FUT + 7) // 8 * 8          # padded output rows (8)
SCALE = 1.0 / math.sqrt(EMBED)
LN_EPS = 1e-5
LEAKY = 0.01


# --------------------------------- the kernel ---------------------------------
def viewport_kernel(x_ref, cw_ref, cb_ref, lw_ref, lb_ref, lg_ref, lbt_ref,
                    wf_ref, lf_ref, lbf_ref, btp_ref,
                    out_ref, k_buf, v_buf):
    # Hoist only the small (1, .) rows; large weight tiles are indexed at their dot
    # sites so Mosaic can schedule their loads next to uses (short live ranges, no
    # spills across the fully unrolled autoregressive loop).
    conv_b = cb_ref[...]          # (1, 256)
    lin_b = lb_ref[...]           # (1, E)
    ln_g = lg_ref[...]            # (1, E)
    ln_b = lbt_ref[...]           # (1, E)
    lin_b_f = lbf_ref[...]        # (1, 192)   lin_b @ w_fused
    bt = btp_ref[...]             # (1, 128)   task-head bias, lanes FEAT..127 zero

    # v_buf zero-init is load-bearing: masked softmax rows underflow exp() to
    # exactly 0, but 0 * stale-NaN in the p-weighted V sum would still be NaN.
    # k_buf needs no init (stale rows are masked out of the scores) and out_ref
    # needs no init (the wrapper only reads rows < FUT, lanes < FEAT).
    v_buf[...] = jnp.zeros_like(v_buf)

    # ---- embed history: Conv1d(1,256,3) == dense(3->256), LeakyReLU, Linear, LN ----
    z = jnp.dot(x_ref[...], cw_ref[...], preferred_element_type=jnp.float32) + conv_b
    z = jnp.maximum(z, LEAKY * z)                                         # LeakyReLU
    e = jnp.dot(z, lw_ref[...], preferred_element_type=jnp.float32) + lin_b   # (SEQ, E)
    mu = jnp.mean(e, axis=-1, keepdims=True)
    var = jnp.mean((e - mu) ** 2, axis=-1, keepdims=True)
    e = (e - mu) * lax.rsqrt(var + LN_EPS) * ln_g + ln_b

    # fused projection: columns = [ v @ (wo@wt) lane-padded to 128 | wq*SCALE | wk ]
    qkv_h = jnp.dot(e, wf_ref[...], preferred_element_type=jnp.float32)   # (SEQ, 192)
    v_buf[0:SEQ, :] = qkv_h[:, 0:LANE]
    k_buf[0:SEQ, :] = qkv_h[:, LANE + EMBED:LANE + 2 * EMBED]
    q0 = qkv_h[SEQ - 1:SEQ, LANE:LANE + EMBED]                            # (1, E)

    pos = lax.broadcasted_iota(jnp.int32, (MAX_LEN, 1), 0)                # hoisted

    # ---- synthetic plm: single-head attention, query = last valid token ----
    # V rows are pre-projected by the task head, so the epilogue is just the
    # p-weighted row sum plus bias (no extra matmul on the serial chain).
    def attend(q_row, valid_len):
        # q.K^T on the VPU (broadcast-mul) + XLU lane reduce — no tiny MXU matmul,
        # no implicit K transpose.
        scores = jnp.sum(k_buf[...] * q_row, axis=-1, keepdims=True)      # (MAX_LEN, 1)
        scores = jnp.where(pos < valid_len, scores, -1e30)
        scores = scores - jnp.max(scores, axis=0, keepdims=True)
        p = jnp.exp(scores)
        p = p / jnp.sum(p, axis=0, keepdims=True)                         # exact divide
        return jnp.sum(p * v_buf[...], axis=0, keepdims=True) + bt        # (1, 128)

    # step 0: query is the last (layernormed) history token
    logits0 = attend(q0, SEQ)
    out_ref[0:1, :] = logits0

    # steps 1..FUT-1: embed + project the PREVIOUS step's logits (exactly the torch
    # append, no LayerNorm, so Linear is folded into the fused projection -> one
    # matmul), write its K/V row, then attend.  Because the append happens at the
    # start of the step, the final step's logits are never embedded.
    def step(t, prev_logits):
        zz = jnp.dot(prev_logits, cw_ref[...], preferred_element_type=jnp.float32) + conv_b
        zz = jnp.maximum(zz, LEAKY * zz)
        qkv_new = jnp.dot(zz, lf_ref[...],
                          preferred_element_type=jnp.float32) + lin_b_f   # (1, 192)
        row = SEQ + t - 1
        v_buf[pl.ds(row, 1), :] = qkv_new[:, 0:LANE]
        k_buf[pl.ds(row, 1), :] = qkv_new[:, LANE + EMBED:LANE + 2 * EMBED]
        logits = attend(qkv_new[:, LANE:LANE + EMBED], SEQ + t)
        out_ref[pl.ds(t, 1), :] = logits
        return logits

    lax.fori_loop(1, FUT, step, logits0, unroll=True)


# --------------------------------- wrapper ---------------------------------
def viewport_prediction_forward(x, params):
    """x: (1, SEQ, FEAT).  Returns stacked per-step logits (FUT, FEAT)."""
    x2d = x[0].astype(jnp.float32)                                        # (SEQ, FEAT)

    # layout plumbing + weight fusion (wrapper-side, runs once):
    #   * lane-pad coords and conv rows so the lane-padded logits path is exact,
    #   * wot = wo @ wt, lane-padded; folded into the wv columns of the fused weight,
    #   * attention scale folded into wq, task-head bias lane-padded,
    #   * Linear folded into the fused projection for the (no-LayerNorm) appended path.
    x_pad = jnp.zeros((SEQ, LANE), jnp.float32).at[:, :FEAT].set(x2d)
    conv_w_pad = jnp.zeros((LANE, CONV_CH), jnp.float32).at[:FEAT, :].set(params["conv_w"])
    wot = params["wo"] @ params["wt"]                                           # (E, FEAT)
    wot_pad = jnp.zeros((EMBED, LANE), jnp.float32).at[:, :FEAT].set(wot)
    w_fused = jnp.concatenate(
        [params["wv"] @ wot_pad, params["wq"] * SCALE, params["wk"]], axis=1)   # (E, 192)
    lin_f = params["lin_w"] @ w_fused                                           # (256, 192)
    lin_b_f = params["lin_b"] @ w_fused                                         # (1, 192)
    bt_pad = jnp.zeros((1, LANE), jnp.float32).at[:, :FEAT].set(params["bt"])

    full2d = lambda shape: pl.BlockSpec(shape, lambda i: (0, 0))
    in_specs = [
        full2d((SEQ, LANE)),          # x (lane-padded)
        full2d((LANE, CONV_CH)),      # conv_w (row-padded)
        full2d((1, CONV_CH)),         # conv_b
        full2d((CONV_CH, EMBED)),     # lin_w (history path only)
        full2d((1, EMBED)),           # lin_b
        full2d((1, EMBED)),           # ln_gamma
        full2d((1, EMBED)),           # ln_beta
        full2d((EMBED, QKV_W)),       # fused [wv@wot | wq*SCALE | wk]
        full2d((CONV_CH, QKV_W)),     # lin_w @ fused (appended-token path)
        full2d((1, QKV_W)),           # lin_b @ fused
        full2d((1, LANE)),            # task_head bias (lane-padded)
    ]

    out = pl.pallas_call(
        viewport_kernel,
        out_shape=jax.ShapeDtypeStruct((OUT_ROWS, LANE), jnp.float32),
        grid_spec=pltpu.PrefetchScalarGridSpec(
            num_scalar_prefetch=0,
            grid=(1,),                                   # single invocation; loop is in-kernel
            in_specs=in_specs,
            out_specs=pl.BlockSpec((OUT_ROWS, LANE), lambda i: (0, 0)),
            scratch_shapes=[pltpu.VMEM((MAX_LEN, EMBED), jnp.float32),   # K cache
                            pltpu.VMEM((MAX_LEN, LANE), jnp.float32)],  # V cache (pre-projected)
        ),
        compiler_params=pltpu.CompilerParams(
            dimension_semantics=("arbitrary",)),
    )(x_pad, conv_w_pad, params["conv_b"], params["lin_w"], params["lin_b"],
      params["ln_g"], params["ln_b"], w_fused, lin_f, lin_b_f, bt_pad)

    return out[:FUT, :FEAT]


# ----------------------------- pure-JAX reference -----------------------------
def reference_forward(x, p):
    def embed_tok(tok):
        z = tok @ p["conv_w"] + p["conv_b"]
        z = jnp.where(z > 0, z, LEAKY * z)
        return z @ p["lin_w"] + p["lin_b"]

    e = embed_tok(x[0])                                              # (SEQ, E)
    mu = jnp.mean(e, axis=-1, keepdims=True)
    var = jnp.mean((e - mu) ** 2, axis=-1, keepdims=True)
    seq = (e - mu) / jnp.sqrt(var + LN_EPS) * p["ln_g"] + p["ln_b"]

    outs = []
    for _ in range(FUT):
        q = seq[-1:] @ p["wq"]
        k = seq @ p["wk"]
        v = seq @ p["wv"]
        a = jax.nn.softmax((q @ k.T) * SCALE, axis=-1)
        logits = ((a @ v) @ p["wo"]) @ p["wt"] + p["bt"]             # (1, 3)
        outs.append(logits)
        seq = jnp.concatenate([seq, embed_tok(logits)], axis=0)
    return jnp.concatenate(outs, axis=0)


# --------------------------------- main ---------------------------------
def make_params(key):
    ks = jax.random.split(key, 16)
    f = jnp.float32
    return {
        "conv_w": (0.3 * jax.random.normal(ks[0], (FEAT, CONV_CH))).astype(f),
        "conv_b": (0.1 * jax.random.normal(ks[1], (1, CONV_CH))).astype(f),
        "lin_w":  (0.05 * jax.random.normal(ks[2], (CONV_CH, EMBED))).astype(f),
        "lin_b":  (0.1 * jax.random.normal(ks[3], (1, EMBED))).astype(f),
        "ln_g":   (1.0 + 0.05 * jax.random.normal(ks[4], (1, EMBED))).astype(f),
        "ln_b":   (0.05 * jax.random.normal(ks[5], (1, EMBED))).astype(f),
        "wq":     (0.2 * jax.random.normal(ks[6], (EMBED, EMBED))).astype(f),
        "wk":     (0.2 * jax.random.normal(ks[7], (EMBED, EMBED))).astype(f),
        "wv":     (0.2 * jax.random.normal(ks[8], (EMBED, EMBED))).astype(f),
        "wo":     (0.2 * jax.random.normal(ks[9], (EMBED, EMBED))).astype(f),
        "wt":     (0.2 * jax.random.normal(ks[10], (EMBED, FEAT))).astype(f),
        "bt":     (0.05 * jax.random.normal(ks[11], (1, FEAT))).astype(f),
    }


if __name__ == "__main__":
    key = jax.random.PRNGKey(0)
    k_x, k_p = jax.random.split(key)
    # history viewport trajectory: (batch=1, seq=8, coords=3)
    x = jax.random.normal(k_x, (BATCH, SEQ, FEAT), dtype=jnp.float32)
    # video_user_position is only consumed by the multimodal path (disabled here).
    video_user_position = jnp.array([1, 0, 1], dtype=jnp.int32)

    params = make_params(k_p)

    out = viewport_prediction_forward(x, params)
    out = jax.block_until_ready(out)

    ref = jax.block_until_ready(reference_forward(x, params))
    # tolerance accounts for the wrapper-side weight reassociations (wo@wt, wv@wot,
    # lin_w@w_fused) compounded over the 4 autoregressive steps (softmax uses an
    # exact divide now, so no approx-reciprocal error term).
    np.testing.assert_allclose(np.asarray(out), np.asarray(ref), rtol=2e-3, atol=2e-3)

    # mimic the torch return value: a list of per-step logits of shape (1, 1, 3)
    outputlist = [out[t].reshape(1, 1, FEAT) for t in range(FUT)]
    assert len(outputlist) == FUT and outputlist[0].shape == (1, 1, FEAT)

    print("KERNEL_OK")
</pallas_src>

<mosaic_0001>
module attributes {stable_mosaic.version = 11 : i64} {
  func.func @viewport_kernel(%arg0: i32, %arg1: memref<8x128xf32, #tpu.memory_space<vmem>>, %arg2: memref<128x256xf32, #tpu.memory_space<vmem>>, %arg3: memref<1x256xf32, #tpu.memory_space<vmem>>, %arg4: memref<256x32xf32, #tpu.memory_space<vmem>>, %arg5: memref<1x32xf32, #tpu.memory_space<vmem>>, %arg6: memref<1x32xf32, #tpu.memory_space<vmem>>, %arg7: memref<1x32xf32, #tpu.memory_space<vmem>>, %arg8: memref<32x192xf32, #tpu.memory_space<vmem>>, %arg9: memref<256x192xf32, #tpu.memory_space<vmem>>, %arg10: memref<1x192xf32, #tpu.memory_space<vmem>>, %arg11: memref<1x128xf32, #tpu.memory_space<vmem>>, %arg12: memref<8x128xf32, #tpu.memory_space<vmem>>, %arg13: memref<16x32xf32, #tpu.memory_space<vmem>>, %arg14: memref<16x128xf32, #tpu.memory_space<vmem>>) attributes {dimension_semantics = [#tpu.dimension_semantics<arbitrary>], iteration_bounds = array<i64: 1>, scalar_prefetch = 0 : i64, scratch_operands = 2 : i64, tpu.core_type = #tpu.core_type<tc>, window_params = [{pipeline_mode = #tpu.pipeline_mode<synchronous>, transform_indices = @transform_0, window_bounds = array<i64: 8, 128>}, {pipeline_mode = #tpu.pipeline_mode<synchronous>, transform_indices = @transform_1, window_bounds = array<i64: 128, 256>}, {pipeline_mode = #tpu.pipeline_mode<synchronous>, transform_indices = @transform_2, window_bounds = array<i64: 1, 256>}, {pipeline_mode = #tpu.pipeline_mode<synchronous>, transform_indices = @transform_3, window_bounds = array<i64: 256, 32>}, {pipeline_mode = #tpu.pipeline_mode<synchronous>, transform_indices = @transform_4, window_bounds = array<i64: 1, 32>}, {pipeline_mode = #tpu.pipeline_mode<synchronous>, transform_indices = @transform_5, window_bounds = array<i64: 1, 32>}, {pipeline_mode = #tpu.pipeline_mode<synchronous>, transform_indices = @transform_6, window_bounds = array<i64: 1, 32>}, {pipeline_mode = #tpu.pipeline_mode<synchronous>, transform_indices = @transform_7, window_bounds = array<i64: 32, 192>}, {pipeline_mode = #tpu.pipeline_mode<synchronous>, transform_indices = @transform_8, window_bounds = array<i64: 256, 192>}, {pipeline_mode = #tpu.pipeline_mode<synchronous>, transform_indices = @transform_9, window_bounds = array<i64: 1, 192>}, {pipeline_mode = #tpu.pipeline_mode<synchronous>, transform_indices = @transform_10, window_bounds = array<i64: 1, 128>}, {pipeline_mode = #tpu.pipeline_mode<synchronous>, transform_indices = @transform_11, window_bounds = array<i64: 8, 128>}]} {
    %c0 = arith.constant 0 : index
    %c0_0 = arith.constant 0 : index
    %0 = vector.load %arg3[%c0, %c0_0] : memref<1x256xf32, #tpu.memory_space<vmem>>, vector<1x256xf32>
    %c0_1 = arith.constant 0 : index
    %c0_2 = arith.constant 0 : index
    %1 = vector.load %arg5[%c0_1, %c0_2] : memref<1x32xf32, #tpu.memory_space<vmem>>, vector<1x32xf32>
    %c0_3 = arith.constant 0 : index
    %c0_4 = arith.constant 0 : index
    %2 = vector.load %arg6[%c0_3, %c0_4] : memref<1x32xf32, #tpu.memory_space<vmem>>, vector<1x32xf32>
    %c0_5 = arith.constant 0 : index
    %c0_6 = arith.constant 0 : index
    %3 = vector.load %arg7[%c0_5, %c0_6] : memref<1x32xf32, #tpu.memory_space<vmem>>, vector<1x32xf32>
    %c0_7 = arith.constant 0 : index
    %c0_8 = arith.constant 0 : index
    %4 = vector.load %arg10[%c0_7, %c0_8] : memref<1x192xf32, #tpu.memory_space<vmem>>, vector<1x192xf32>
    %c0_9 = arith.constant 0 : index
    %c0_10 = arith.constant 0 : index
    %5 = vector.load %arg11[%c0_9, %c0_10] : memref<1x128xf32, #tpu.memory_space<vmem>>, vector<1x128xf32>
    %cst = arith.constant 0.000000e+00 : f32
    %6 = vector.broadcast %cst : f32 to vector<16x128xf32>
    %c0_11 = arith.constant 0 : index
    %c0_12 = arith.constant 0 : index
    %7 = vector.load %arg14[%c0_11, %c0_12] : memref<16x128xf32, #tpu.memory_space<vmem>>, vector<16x128xf32>
    tpu.vector_store %arg14[%c0_11, %c0_12], %6 {strides = array<i32>} : memref<16x128xf32, #tpu.memory_space<vmem>>, vector<16x128xf32>,
    %c0_13 = arith.constant 0 : index
    %c0_14 = arith.constant 0 : index
    %8 = vector.load %arg1[%c0_13, %c0_14] : memref<8x128xf32, #tpu.memory_space<vmem>>, vector<8x128xf32>
    %c0_15 = arith.constant 0 : index
    %c0_16 = arith.constant 0 : index
    %9 = vector.load %arg2[%c0_15, %c0_16] : memref<128x256xf32, #tpu.memory_space<vmem>>, vector<128x256xf32>
    %cst_17 = arith.constant dense<0.000000e+00> : vector<8x256xf32>
    %10 = tpu.matmul %8, %9, %cst_17 {dimension_numbers = #tpu.dot_dimension_numbers<[1], [0], [0], [1], [0, 0, 1, 1], [], []>} : vector<8x128xf32>, vector<128x256xf32>, vector<8x256xf32> -> vector<8x256xf32>
    %11 = vector.broadcast %0 : vector<1x256xf32> to vector<8x256xf32>
    %12 = arith.addf %10, %11 : vector<8x256xf32>
    %cst_18 = arith.constant 0.00999999977 : f32
    %13 = vector.broadcast %cst_18 : f32 to vector<8x256xf32>
    %14 = arith.mulf %13, %12 : vector<8x256xf32>
    %15 = arith.maximumf %12, %14 : vector<8x256xf32>
    %c0_19 = arith.constant 0 : index
    %c0_20 = arith.constant 0 : index
    %16 = vector.load %arg4[%c0_19, %c0_20] : memref<256x32xf32, #tpu.memory_space<vmem>>, vector<256x32xf32>
    %cst_21 = arith.constant dense<0.000000e+00> : vector<8x32xf32>
    %17 = tpu.matmul %15, %16, %cst_21 {dimension_numbers = #tpu.dot_dimension_numbers<[1], [0], [0], [1], [0, 0, 1, 1], [], []>} : vector<8x256xf32>, vector<256x32xf32>, vector<8x32xf32> -> vector<8x32xf32>
    %18 = vector.broadcast %1 : vector<1x32xf32> to vector<8x32xf32>
    %19 = arith.addf %17, %18 : vector<8x32xf32>
    %cst_22 = arith.constant dense<0.000000e+00> : vector<8xf32>
    %20 = vector.multi_reduction <add>, %19, %cst_22 [1] : vector<8x32xf32> to vector<8xf32>
    %21 = vector.shape_cast %20 : vector<8xf32> to vector<8x1xf32>
    %cst_23 = arith.constant 3.200000e+01 : f32
    %22 = vector.broadcast %cst_23 : f32 to vector<8x1xf32>
    %23 = arith.divf %21, %22 : vector<8x1xf32>
    %24 = vector.broadcast %23 : vector<8x1xf32> to vector<8x32xf32>
    %25 = arith.subf %19, %24 : vector<8x32xf32>
    %26 = arith.mulf %25, %25 : vector<8x32xf32>
    %cst_24 = arith.constant dense<0.000000e+00> : vector<8xf32>
    %27 = vector.multi_reduction <add>, %26, %cst_24 [1] : vector<8x32xf32> to vector<8xf32>
    %28 = vector.shape_cast %27 : vector<8xf32> to vector<8x1xf32>
    %cst_25 = arith.constant 3.200000e+01 : f32
    %29 = vector.broadcast %cst_25 : f32 to vector<8x1xf32>
    %30 = arith.divf %28, %29 : vector<8x1xf32>
    %31 = vector.broadcast %23 : vector<8x1xf32> to vector<8x32xf32>
    %32 = arith.subf %19, %31 : vector<8x32xf32>
    %cst_26 = arith.constant 9.99999974E-6 : f32
    %33 = vector.broadcast %cst_26 : f32 to vector<8x1xf32>
    %34 = arith.addf %30, %33 : vector<8x1xf32>
    %35 = math.rsqrt %34 : vector<8x1xf32>
    %36 = vector.broadcast %35 : vector<8x1xf32> to vector<8x32xf32>
    %37 = arith.mulf %32, %36 : vector<8x32xf32>
    %38 = vector.broadcast %2 : vector<1x32xf32> to vector<8x32xf32>
    %39 = arith.mulf %37, %38 : vector<8x32xf32>
    %40 = vector.broadcast %3 : vector<1x32xf32> to vector<8x32xf32>
    %41 = arith.addf %39, %40 : vector<8x32xf32>
    %c0_27 = arith.constant 0 : index
    %c0_28 = arith.constant 0 : index
    %42 = vector.load %arg8[%c0_27, %c0_28] : memref<32x192xf32, #tpu.memory_space<vmem>>, vector<32x192xf32>
    %cst_29 = arith.constant dense<0.000000e+00> : vector<8x192xf32>
    %43 = tpu.matmul %41, %42, %cst_29 {dimension_numbers = #tpu.dot_dimension_numbers<[1], [0], [0], [1], [0, 0, 1, 1], [], []>} : vector<8x32xf32>, vector<32x192xf32>, vector<8x192xf32> -> vector<8x192xf32>
    %44 = vector.extract_strided_slice %43 {offsets = [0, 0], sizes = [8, 128], strides = [1, 1]} : vector<8x192xf32> to vector<8x128xf32>
    %c0_30 = arith.constant 0 : index
    %c0_31 = arith.constant 0 : index
    %45 = vector.load %arg14[%c0_30, %c0_31] : memref<16x128xf32, #tpu.memory_space<vmem>>, vector<8x128xf32>
    tpu.vector_store %arg14[%c0_30, %c0_31], %44 {strides = array<i32>} : memref<16x128xf32, #tpu.memory_space<vmem>>, vector<8x128xf32>,
    %46 = vector.extract_strided_slice %43 {offsets = [0, 160], sizes = [8, 32], strides = [1, 1]} : vector<8x192xf32> to vector<8x32xf32>
    %c0_32 = arith.constant 0 : index
    %c0_33 = arith.constant 0 : index
    %47 = vector.load %arg13[%c0_32, %c0_33] : memref<16x32xf32, #tpu.memory_space<vmem>>, vector<8x32xf32>
    tpu.vector_store %arg13[%c0_32, %c0_33], %46 {strides = array<i32>} : memref<16x32xf32, #tpu.memory_space<vmem>>, vector<8x32xf32>,
    %48 = vector.extract_strided_slice %43 {offsets = [7, 128], sizes = [1, 32], strides = [1, 1]} : vector<8x192xf32> to vector<1x32xf32>
    %49 = tpu.iota {dimensions = array<i32: 0>} : vector<16x1xi32>
    %c0_34 = arith.constant 0 : index
    %c0_35 = arith.constant 0 : index
    %50 = vector.load %arg13[%c0_34, %c0_35] : memref<16x32xf32, #tpu.memory_space<vmem>>, vector<16x32xf32>
    %51 = vector.broadcast %48 : vector<1x32xf32> to vector<16x32xf32>
    %52 = arith.mulf %50, %51 : vector<16x32xf32>
    %cst_36 = arith.constant dense<0.000000e+00> : vector<16xf32>
    %53 = vector.multi_reduction <add>, %52, %cst_36 [1] : vector<16x32xf32> to vector<16xf32>
    %54 = vector.shape_cast %53 : vector<16xf32> to vector<16x1xf32>
    %c8_i32 = arith.constant 8 : i32
    %55 = vector.broadcast %c8_i32 : i32 to vector<16x1xi32>
    %56 = arith.cmpi slt, %49, %55 : vector<16x1xi32>
    %cst_37 = arith.constant -1.000000e+30 : f32
    %57 = vector.broadcast %cst_37 : f32 to vector<16x1xf32>
    %58 = arith.select %56, %54, %57 : vector<16x1xi1>, vector<16x1xf32>
    %cst_38 = arith.constant dense<0xFF800000> : vector<1xf32>
    %59 = vector.multi_reduction <maximumf>, %58, %cst_38 [0] : vector<16x1xf32> to vector<1xf32>
    %60 = vector.shape_cast %59 : vector<1xf32> to vector<1x1xf32>
    %61 = vector.broadcast %60 : vector<1x1xf32> to vector<16x1xf32>
    %62 = arith.subf %58, %61 : vector<16x1xf32>
    %63 = math.exp %62 : vector<16x1xf32>
    %cst_39 = arith.constant dense<0.000000e+00> : vector<1xf32>
    %64 = vector.multi_reduction <add>, %63, %cst_39 [0] : vector<16x1xf32> to vector<1xf32>
    %65 = vector.shape_cast %64 : vector<1xf32> to vector<1x1xf32>
    %66 = vector.broadcast %65 : vector<1x1xf32> to vector<16x1xf32>
    %67 = arith.divf %63, %66 : vector<16x1xf32>
    %c0_40 = arith.constant 0 : index
    %c0_41 = arith.constant 0 : index
    %68 = vector.load %arg14[%c0_40, %c0_41] : memref<16x128xf32, #tpu.memory_space<vmem>>, vector<16x128xf32>
    %69 = vector.broadcast %67 : vector<16x1xf32> to vector<16x128xf32>
    %70 = arith.mulf %69, %68 : vector<16x128xf32>
    %cst_42 = arith.constant dense<0.000000e+00> : vector<128xf32>
    %71 = vector.multi_reduction <add>, %70, %cst_42 [0] : vector<16x128xf32> to vector<128xf32>
    %72 = vector.shape_cast %71 : vector<128xf32> to vector<1x128xf32>
    %73 = arith.addf %72, %5 : vector<1x128xf32>
    %c0_43 = arith.constant 0 : index
    %c0_44 = arith.constant 0 : index
    %74 = vector.load %arg12[%c0_43, %c0_44] : memref<8x128xf32, #tpu.memory_space<vmem>>, vector<1x128xf32>
    tpu.vector_store %arg12[%c0_43, %c0_44], %73 {strides = array<i32>} : memref<8x128xf32, #tpu.memory_space<vmem>>, vector<1x128xf32>,
    %c1_i32 = arith.constant 1 : i32
    %c0_45 = arith.constant 0 : index
    %c0_46 = arith.constant 0 : index
    %75 = vector.load %arg2[%c0_45, %c0_46] : memref<128x256xf32, #tpu.memory_space<vmem>>, vector<128x256xf32>
    %cst_47 = arith.constant dense<0.000000e+00> : vector<1x256xf32>
    %76 = tpu.matmul %73, %75, %cst_47 {dimension_numbers = #tpu.dot_dimension_numbers<[1], [0], [0], [1], [0, 0, 1, 1], [], []>} : vector<1x128xf32>, vector<128x256xf32>, vector<1x256xf32> -> vector<1x256xf32>
    %77 = arith.addf %76, %0 : vector<1x256xf32>
    %cst_48 = arith.constant 0.00999999977 : f32
    %78 = vector.broadcast %cst_48 : f32 to vector<1x256xf32>
    %79 = arith.mulf %78, %77 : vector<1x256xf32>
    %80 = arith.maximumf %77, %79 : vector<1x256xf32>
    %c0_49 = arith.constant 0 : index
    %c0_50 = arith.constant 0 : index
    %81 = vector.load %arg9[%c0_49, %c0_50] : memref<256x192xf32, #tpu.memory_space<vmem>>, vector<256x192xf32>
    %cst_51 = arith.constant dense<0.000000e+00> : vector<1x192xf32>
    %82 = tpu.matmul %80, %81, %cst_51 {dimension_numbers = #tpu.dot_dimension_numbers<[1], [0], [0], [1], [0, 0, 1, 1], [], []>} : vector<1x256xf32>, vector<256x192xf32>, vector<1x192xf32> -> vector<1x192xf32>
    %83 = arith.addf %82, %4 : vector<1x192xf32>
    %c8_i32_52 = arith.constant 8 : i32
    %84 = arith.addi %c8_i32_52, %c1_i32 : i32
    %c1_i32_53 = arith.constant 1 : i32
    %85 = arith.subi %84, %c1_i32_53 : i32
    %86 = vector.extract_strided_slice %83 {offsets = [0, 0], sizes = [1, 128], strides = [1, 1]} : vector<1x192xf32> to vector<1x128xf32>
    %87 = arith.index_cast %85 : i32 to index
    %c0_54 = arith.constant 0 : index
    %88 = vector.load %arg14[%87, %c0_54] : memref<16x128xf32, #tpu.memory_space<vmem>>, vector<1x128xf32>
    tpu.vector_store %arg14[%87, %c0_54], %86 {strides = array<i32>} : memref<16x128xf32, #tpu.memory_space<vmem>>, vector<1x128xf32>,
    %89 = vector.extract_strided_slice %83 {offsets = [0, 160], sizes = [1, 32], strides = [1, 1]} : vector<1x192xf32> to vector<1x32xf32>
    %90 = arith.index_cast %85 : i32 to index
    %c0_55 = arith.constant 0 : index
    %91 = vector.load %arg13[%90, %c0_55] : memref<16x32xf32, #tpu.memory_space<vmem>>, vector<1x32xf32>
    tpu.vector_store %arg13[%90, %c0_55], %89 {strides = array<i32>} : memref<16x32xf32, #tpu.memory_space<vmem>>, vector<1x32xf32>,
    %92 = vector.extract_strided_slice %83 {offsets = [0, 128], sizes = [1, 32], strides = [1, 1]} : vector<1x192xf32> to vector<1x32xf32>
    %c8_i32_56 = arith.constant 8 : i32
    %93 = arith.addi %c8_i32_56, %c1_i32 : i32
    %c0_57 = arith.constant 0 : index
    %c0_58 = arith.constant 0 : index
    %94 = vector.load %arg13[%c0_57, %c0_58] : memref<16x32xf32, #tpu.memory_space<vmem>>, vector<16x32xf32>
    %95 = vector.broadcast %92 : vector<1x32xf32> to vector<16x32xf32>
    %96 = arith.mulf %94, %95 : vector<16x32xf32>
    %cst_59 = arith.constant dense<0.000000e+00> : vector<16xf32>
    %97 = vector.multi_reduction <add>, %96, %cst_59 [1] : vector<16x32xf32> to vector<16xf32>
    %98 = vector.shape_cast %97 : vector<16xf32> to vector<16x1xf32>
    %99 = vector.broadcast %93 : i32 to vector<16x1xi32>
    %100 = arith.cmpi slt, %49, %99 : vector<16x1xi32>
    %cst_60 = arith.constant -1.000000e+30 : f32
    %101 = vector.broadcast %cst_60 : f32 to vector<16x1xf32>
    %102 = arith.select %100, %98, %101 : vector<16x1xi1>, vector<16x1xf32>
    %cst_61 = arith.constant dense<0xFF800000> : vector<1xf32>
    %103 = vector.multi_reduction <maximumf>, %102, %cst_61 [0] : vector<16x1xf32> to vector<1xf32>
    %104 = vector.shape_cast %103 : vector<1xf32> to vector<1x1xf32>
    %105 = vector.broadcast %104 : vector<1x1xf32> to vector<16x1xf32>
    %106 = arith.subf %102, %105 : vector<16x1xf32>
    %107 = math.exp %106 : vector<16x1xf32>
    %cst_62 = arith.constant dense<0.000000e+00> : vector<1xf32>
    %108 = vector.multi_reduction <add>, %107, %cst_62 [0] : vector<16x1xf32> to vector<1xf32>
    %109 = vector.shape_cast %108 : vector<1xf32> to vector<1x1xf32>
    %110 = vector.broadcast %109 : vector<1x1xf32> to vector<16x1xf32>
    %111 = arith.divf %107, %110 : vector<16x1xf32>
    %c0_63 = arith.constant 0 : index
    %c0_64 = arith.constant 0 : index
    %112 = vector.load %arg14[%c0_63, %c0_64] : memref<16x128xf32, #tpu.memory_space<vmem>>, vector<16x128xf32>
    %113 = vector.broadcast %111 : vector<16x1xf32> to vector<16x128xf32>
    %114 = arith.mulf %113, %112 : vector<16x128xf32>
    %cst_65 = arith.constant dense<0.000000e+00> : vector<128xf32>
    %115 = vector.multi_reduction <add>, %114, %cst_65 [0] : vector<16x128xf32> to vector<128xf32>
    %116 = vector.shape_cast %115 : vector<128xf32> to vector<1x128xf32>
    %117 = arith.addf %116, %5 : vector<1x128xf32>
    %118 = arith.index_cast %c1_i32 : i32 to index
    %c0_66 = arith.constant 0 : index
    %119 = vector.load %arg12[%118, %c0_66] : memref<8x128xf32, #tpu.memory_space<vmem>>, vector<1x128xf32>
    tpu.vector_store %arg12[%118, %c0_66], %117 {strides = array<i32>} : memref<8x128xf32, #tpu.memory_space<vmem>>, vector<1x128xf32>,
    %c2_i32 = arith.constant 2 : i32
    %c0_67 = arith.constant 0 : index
    %c0_68 = arith.constant 0 : index
    %120 = vector.load %arg2[%c0_67, %c0_68] : memref<128x256xf32, #tpu.memory_space<vmem>>, vector<128x256xf32>
    %cst_69 = arith.constant dense<0.000000e+00> : vector<1x256xf32>
    %121 = tpu.matmul %117, %120, %cst_69 {dimension_numbers = #tpu.dot_dimension_numbers<[1], [0], [0], [1], [0, 0, 1, 1], [], []>} : vector<1x128xf32>, vector<128x256xf32>, vector<1x256xf32> -> vector<1x256xf32>
    %122 = arith.addf %121, %0 : vector<1x256xf32>
    %cst_70 = arith.constant 0.00999999977 : f32
    %123 = vector.broadcast %cst_70 : f32 to vector<1x256xf32>
    %124 = arith.mulf %123, %122 : vector<1x256xf32>
    %125 = arith.maximumf %122, %124 : vector<1x256xf32>
    %c0_71 = arith.constant 0 : index
    %c0_72 = arith.constant 0 : index
    %126 = vector.load %arg9[%c0_71, %c0_72] : memref<256x192xf32, #tpu.memory_space<vmem>>, vector<256x192xf32>
    %cst_73 = arith.constant dense<0.000000e+00> : vector<1x192xf32>
    %127 = tpu.matmul %125, %126, %cst_73 {dimension_numbers = #tpu.dot_dimension_numbers<[1], [0], [0], [1], [0, 0, 1, 1], [], []>} : vector<1x256xf32>, vector<256x192xf32>, vector<1x192xf32> -> vector<1x192xf32>
    %128 = arith.addf %127, %4 : vector<1x192xf32>
    %c8_i32_74 = arith.constant 8 : i32
    %129 = arith.addi %c8_i32_74, %c2_i32 : i32
    %c1_i32_75 = arith.constant 1 : i32
    %130 = arith.subi %129, %c1_i32_75 : i32
    %131 = vector.extract_strided_slice %128 {offsets = [0, 0], sizes = [1, 128], strides = [1, 1]} : vector<1x192xf32> to vector<1x128xf32>
    %132 = arith.index_cast %130 : i32 to index
    %c0_76 = arith.constant 0 : index
    %133 = vector.load %arg14[%132, %c0_76] : memref<16x128xf32, #tpu.memory_space<vmem>>, vector<1x128xf32>
    tpu.vector_store %arg14[%132, %c0_76], %131 {strides = array<i32>} : memref<16x128xf32, #tpu.memory_space<vmem>>, vector<1x128xf32>,
    %134 = vector.extract_strided_slice %128 {offsets = [0, 160], sizes = [1, 32], strides = [1, 1]} : vector<1x192xf32> to vector<1x32xf32>
    %135 = arith.index_cast %130 : i32 to index
    %c0_77 = arith.constant 0 : index
    %136 = vector.load %arg13[%135, %c0_77] : memref<16x32xf32, #tpu.memory_space<vmem>>, vector<1x32xf32>
    tpu.vector_store %arg13[%135, %c0_77], %134 {strides = array<i32>} : memref<16x32xf32, #tpu.memory_space<vmem>>, vector<1x32xf32>,
    %137 = vector.extract_strided_slice %128 {offsets = [0, 128], sizes = [1, 32], strides = [1, 1]} : vector<1x192xf32> to vector<1x32xf32>
    %c8_i32_78 = arith.constant 8 : i32
    %138 = arith.addi %c8_i32_78, %c2_i32 : i32
    %c0_79 = arith.constant 0 : index
    %c0_80 = arith.constant 0 : index
    %139 = vector.load %arg13[%c0_79, %c0_80] : memref<16x32xf32, #tpu.memory_space<vmem>>, vector<16x32xf32>
    %140 = vector.broadcast %137 : vector<1x32xf32> to vector<16x32xf32>
    %141 = arith.mulf %139, %140 : vector<16x32xf32>
    %cst_81 = arith.constant dense<0.000000e+00> : vector<16xf32>
    %142 = vector.multi_reduction <add>, %141, %cst_81 [1] : vector<16x32xf32> to vector<16xf32>
    %143 = vector.shape_cast %142 : vector<16xf32> to vector<16x1xf32>
    %144 = vector.broadcast %138 : i32 to vector<16x1xi32>
    %145 = arith.cmpi slt, %49, %144 : vector<16x1xi32>
    %cst_82 = arith.constant -1.000000e+30 : f32
    %146 = vector.broadcast %cst_82 : f32 to vector<16x1xf32>
    %147 = arith.select %145, %143, %146 : vector<16x1xi1>, vector<16x1xf32>
    %cst_83 = arith.constant dense<0xFF800000> : vector<1xf32>
    %148 = vector.multi_reduction <maximumf>, %147, %cst_83 [0] : vector<16x1xf32> to vector<1xf32>
    %149 = vector.shape_cast %148 : vector<1xf32> to vector<1x1xf32>
    %150 = vector.broadcast %149 : vector<1x1xf32> to vector<16x1xf32>
    %151 = arith.subf %147, %150 : vector<16x1xf32>
    %152 = math.exp %151 : vector<16x1xf32>
    %cst_84 = arith.constant dense<0.000000e+00> : vector<1xf32>
    %153 = vector.multi_reduction <add>, %152, %cst_84 [0] : vector<16x1xf32> to vector<1xf32>
    %154 = vector.shape_cast %153 : vector<1xf32> to vector<1x1xf32>
    %155 = vector.broadcast %154 : vector<1x1xf32> to vector<16x1xf32>
    %156 = arith.divf %152, %155 : vector<16x1xf32>
    %c0_85 = arith.constant 0 : index
    %c0_86 = arith.constant 0 : index
    %157 = vector.load %arg14[%c0_85, %c0_86] : memref<16x128xf32, #tpu.memory_space<vmem>>, vector<16x128xf32>
    %158 = vector.broadcast %156 : vector<16x1xf32> to vector<16x128xf32>
    %159 = arith.mulf %158, %157 : vector<16x128xf32>
    %cst_87 = arith.constant dense<0.000000e+00> : vector<128xf32>
    %160 = vector.multi_reduction <add>, %159, %cst_87 [0] : vector<16x128xf32> to vector<128xf32>
    %161 = vector.shape_cast %160 : vector<128xf32> to vector<1x128xf32>
    %162 = arith.addf %161, %5 : vector<1x128xf32>
    %163 = arith.index_cast %c2_i32 : i32 to index
    %c0_88 = arith.constant 0 : index
    %164 = vector.load %arg12[%163, %c0_88] : memref<8x128xf32, #tpu.memory_space<vmem>>, vector<1x128xf32>
    tpu.vector_store %arg12[%163, %c0_88], %162 {strides = array<i32>} : memref<8x128xf32, #tpu.memory_space<vmem>>, vector<1x128xf32>,
    %c3_i32 = arith.constant 3 : i32
    %c0_89 = arith.constant 0 : index
    %c0_90 = arith.constant 0 : index
    %165 = vector.load %arg2[%c0_89, %c0_90] : memref<128x256xf32, #tpu.memory_space<vmem>>, vector<128x256xf32>
    %cst_91 = arith.constant dense<0.000000e+00> : vector<1x256xf32>
    %166 = tpu.matmul %162, %165, %cst_91 {dimension_numbers = #tpu.dot_dimension_numbers<[1], [0], [0], [1], [0, 0, 1, 1], [], []>} : vector<1x128xf32>, vector<128x256xf32>, vector<1x256xf32> -> vector<1x256xf32>
    %167 = arith.addf %166, %0 : vector<1x256xf32>
    %cst_92 = arith.constant 0.00999999977 : f32
    %168 = vector.broadcast %cst_92 : f32 to vector<1x256xf32>
    %169 = arith.mulf %168, %167 : vector<1x256xf32>
    %170 = arith.maximumf %167, %169 : vector<1x256xf32>
    %c0_93 = arith.constant 0 : index
    %c0_94 = arith.constant 0 : index
    %171 = vector.load %arg9[%c0_93, %c0_94] : memref<256x192xf32, #tpu.memory_space<vmem>>, vector<256x192xf32>
    %cst_95 = arith.constant dense<0.000000e+00> : vector<1x192xf32>
    %172 = tpu.matmul %170, %171, %cst_95 {dimension_numbers = #tpu.dot_dimension_numbers<[1], [0], [0], [1], [0, 0, 1, 1], [], []>} : vector<1x256xf32>, vector<256x192xf32>, vector<1x192xf32> -> vector<1x192xf32>
    %173 = arith.addf %172, %4 : vector<1x192xf32>
    %c8_i32_96 = arith.constant 8 : i32
    %174 = arith.addi %c8_i32_96, %c3_i32 : i32
    %c1_i32_97 = arith.constant 1 : i32
    %175 = arith.subi %174, %c1_i32_97 : i32
    %176 = vector.extract_strided_slice %173 {offsets = [0, 0], sizes = [1, 128], strides = [1, 1]} : vector<1x192xf32> to vector<1x128xf32>
    %177 = arith.index_cast %175 : i32 to index
    %c0_98 = arith.constant 0 : index
    %178 = vector.load %arg14[%177, %c0_98] : memref<16x128xf32, #tpu.memory_space<vmem>>, vector<1x128xf32>
    tpu.vector_store %arg14[%177, %c0_98], %176 {strides = array<i32>} : memref<16x128xf32, #tpu.memory_space<vmem>>, vector<1x128xf32>,
    %179 = vector.extract_strided_slice %173 {offsets = [0, 160], sizes = [1, 32], strides = [1, 1]} : vector<1x192xf32> to vector<1x32xf32>
    %180 = arith.index_cast %175 : i32 to index
    %c0_99 = arith.constant 0 : index
    %181 = vector.load %arg13[%180, %c0_99] : memref<16x32xf32, #tpu.memory_space<vmem>>, vector<1x32xf32>
    tpu.vector_store %arg13[%180, %c0_99], %179 {strides = array<i32>} : memref<16x32xf32, #tpu.memory_space<vmem>>, vector<1x32xf32>,
    %182 = vector.extract_strided_slice %173 {offsets = [0, 128], sizes = [1, 32], strides = [1, 1]} : vector<1x192xf32> to vector<1x32xf32>
    %c8_i32_100 = arith.constant 8 : i32
    %183 = arith.addi %c8_i32_100, %c3_i32 : i32
    %c0_101 = arith.constant 0 : index
    %c0_102 = arith.constant 0 : index
    %184 = vector.load %arg13[%c0_101, %c0_102] : memref<16x32xf32, #tpu.memory_space<vmem>>, vector<16x32xf32>
    %185 = vector.broadcast %182 : vector<1x32xf32> to vector<16x32xf32>
    %186 = arith.mulf %184, %185 : vector<16x32xf32>
    %cst_103 = arith.constant dense<0.000000e+00> : vector<16xf32>
    %187 = vector.multi_reduction <add>, %186, %cst_103 [1] : vector<16x32xf32> to vector<16xf32>
    %188 = vector.shape_cast %187 : vector<16xf32> to vector<16x1xf32>
    %189 = vector.broadcast %183 : i32 to vector<16x1xi32>
    %190 = arith.cmpi slt, %49, %189 : vector<16x1xi32>
    %cst_104 = arith.constant -1.000000e+30 : f32
    %191 = vector.broadcast %cst_104 : f32 to vector<16x1xf32>
    %192 = arith.select %190, %188, %191 : vector<16x1xi1>, vector<16x1xf32>
    %cst_105 = arith.constant dense<0xFF800000> : vector<1xf32>
    %193 = vector.multi_reduction <maximumf>, %192, %cst_105 [0] : vector<16x1xf32> to vector<1xf32>
    %194 = vector.shape_cast %193 : vector<1xf32> to vector<1x1xf32>
    %195 = vector.broadcast %194 : vector<1x1xf32> to vector<16x1xf32>
    %196 = arith.subf %192, %195 : vector<16x1xf32>
    %197 = math.exp %196 : vector<16x1xf32>
    %cst_106 = arith.constant dense<0.000000e+00> : vector<1xf32>
    %198 = vector.multi_reduction <add>, %197, %cst_106 [0] : vector<16x1xf32> to vector<1xf32>
    %199 = vector.shape_cast %198 : vector<1xf32> to vector<1x1xf32>
    %200 = vector.broadcast %199 : vector<1x1xf32> to vector<16x1xf32>
    %201 = arith.divf %197, %200 : vector<16x1xf32>
    %c0_107 = arith.constant 0 : index
    %c0_108 = arith.constant 0 : index
    %202 = vector.load %arg14[%c0_107, %c0_108] : memref<16x128xf32, #tpu.memory_space<vmem>>, vector<16x128xf32>
    %203 = vector.broadcast %201 : vector<16x1xf32> to vector<16x128xf32>
    %204 = arith.mulf %203, %202 : vector<16x128xf32>
    %cst_109 = arith.constant dense<0.000000e+00> : vector<128xf32>
    %205 = vector.multi_reduction <add>, %204, %cst_109 [0] : vector<16x128xf32> to vector<128xf32>
    %206 = vector.shape_cast %205 : vector<128xf32> to vector<1x128xf32>
    %207 = arith.addf %206, %5 : vector<1x128xf32>
    %208 = arith.index_cast %c3_i32 : i32 to index
    %c0_110 = arith.constant 0 : index
    %209 = vector.load %arg12[%208, %c0_110] : memref<8x128xf32, #tpu.memory_space<vmem>>, vector<1x128xf32>
    tpu.vector_store %arg12[%208, %c0_110], %207 {strides = array<i32>} : memref<8x128xf32, #tpu.memory_space<vmem>>, vector<1x128xf32>,
    %c3_i32_111 = arith.constant 3 : i32
    return
  }
  func.func @transform_0(%arg0: i32) -> (i32, i32) {
    %c0_i32 = arith.constant 0 : i32
    %c0_i32_0 = arith.constant 0 : i32
    %c0_i32_1 = arith.constant 0 : i32
    return %c0_i32, %c0_i32_0 : i32, i32
  }
  func.func @transform_1(%arg0: i32) -> (i32, i32) {
    %c0_i32 = arith.constant 0 : i32
    %c0_i32_0 = arith.constant 0 : i32
    %c0_i32_1 = arith.constant 0 : i32
    return %c0_i32, %c0_i32_0 : i32, i32
  }
  func.func @transform_2(%arg0: i32) -> (i32, i32) {
    %c0_i32 = arith.constant 0 : i32
    %c0_i32_0 = arith.constant 0 : i32
    %c0_i32_1 = arith.constant 0 : i32
    return %c0_i32, %c0_i32_0 : i32, i32
  }
  func.func @transform_3(%arg0: i32) -> (i32, i32) {
    %c0_i32 = arith.constant 0 : i32
    %c0_i32_0 = arith.constant 0 : i32
    %c0_i32_1 = arith.constant 0 : i32
    return %c0_i32, %c0_i32_0 : i32, i32
  }
  func.func @transform_4(%arg0: i32) -> (i32, i32) {
    %c0_i32 = arith.constant 0 : i32
    %c0_i32_0 = arith.constant 0 : i32
    %c0_i32_1 = arith.constant 0 : i32
    return %c0_i32, %c0_i32_0 : i32, i32
  }
  func.func @transform_5(%arg0: i32) -> (i32, i32) {
    %c0_i32 = arith.constant 0 : i32
    %c0_i32_0 = arith.constant 0 : i32
    %c0_i32_1 = arith.constant 0 : i32
    return %c0_i32, %c0_i32_0 : i32, i32
  }
  func.func @transform_6(%arg0: i32) -> (i32, i32) {
    %c0_i32 = arith.constant 0 : i32
    %c0_i32_0 = arith.constant 0 : i32
    %c0_i32_1 = arith.constant 0 : i32
    return %c0_i32, %c0_i32_0 : i32, i32
  }
  func.func @transform_7(%arg0: i32) -> (i32, i32) {
    %c0_i32 = arith.constant 0 : i32
    %c0_i32_0 = arith.constant 0 : i32
    %c0_i32_1 = arith.constant 0 : i32
    return %c0_i32, %c0_i32_0 : i32, i32
  }
  func.func @transform_8(%arg0: i32) -> (i32, i32) {
    %c0_i32 = arith.constant 0 : i32
    %c0_i32_0 = arith.constant 0 : i32
    %c0_i32_1 = arith.constant 0 : i32
    return %c0_i32, %c0_i32_0 : i32, i32
  }
  func.func @transform_9(%arg0: i32) -> (i32, i32) {
    %c0_i32 = arith.constant 0 : i32
    %c0_i32_0 = arith.constant 0 : i32
    %c0_i32_1 = arith.constant 0 : i32
    return %c0_i32, %c0_i32_0 : i32, i32
  }
  func.func @transform_10(%arg0: i32) -> (i32, i32) {
    %c0_i32 = arith.constant 0 : i32
    %c0_i32_0 = arith.constant 0 : i32
    %c0_i32_1 = arith.constant 0 : i32
    return %c0_i32, %c0_i32_0 : i32, i32
  }
  func.func @transform_11(%arg0: i32) -> (i32, i32) {
    %c0_i32 = arith.constant 0 : i32
    %c0_i32_0 = arith.constant 0 : i32
    %c0_i32_1 = arith.constant 0 : i32
    return %c0_i32, %c0_i32_0 : i32, i32
  }
}

</mosaic_0001>

<llo_original>
// kernel: tpu_custom_call.1
$region0: #{tpu_custom_call.1}
  #allocation0 [shape = 'u32[]', space=smem, size = 0x4, offset = 0x4, fixed_abs, tag = 'smem constant byte address 0x4 - core index']
  #allocation1 [shape = 'u32[72,128]{1,0:T(1,128)}', space=vmem, size = 0x9000, scoped, tag = 'internal scratch']
  #allocation2 [shape = 'f32[16,32]{1,0:T(8,128)}', space=vmem, size = 0x2000, scoped, tag = 'scratch operand']
  #allocation3 [shape = 'f32[16,128]{1,0:T(8,128)}', space=vmem, size = 0x2000, scoped, tag = 'scratch operand']
  %s0 = inlined_call_operand.vmem [shape: f32[8,128], index: 0, kind: input, shape index: {}]
  %s1 = inlined_call_operand.vmem [shape: f32[128,256], index: 1, kind: input, shape index: {}]
  %s2 = inlined_call_operand.vmem [shape: f32[1,256], index: 2, kind: input, shape index: {}]
  %s3 = inlined_call_operand.vmem [shape: f32[256,32], index: 3, kind: input, shape index: {}]
  %s4 = inlined_call_operand.vmem [shape: f32[1,32], index: 4, kind: input, shape index: {}]
  %s5 = inlined_call_operand.vmem [shape: f32[1,32], index: 5, kind: input, shape index: {}]
  %s6 = inlined_call_operand.vmem [shape: f32[1,32], index: 6, kind: input, shape index: {}]
  %s7 = inlined_call_operand.vmem [shape: f32[32,192], index: 7, kind: input, shape index: {}]
  %s8 = inlined_call_operand.vmem [shape: f32[256,192], index: 8, kind: input, shape index: {}]
  %s9 = inlined_call_operand.vmem [shape: f32[1,192], index: 9, kind: input, shape index: {}]
  %s10 = inlined_call_operand.vmem [shape: f32[1,128], index: 10, kind: input, shape index: {}]
  %s11 = inlined_call_operand.hbm [shape: f32[8,128], index: 11, kind: output, shape index: {}]
  %s12 = sld [smem:[#allocation0]]
  $region54: #{tpu_custom_call.1} parent=0
    _
  %s14 = ssub.s32 1, %s12
  %s15 = scalar_select 0, %s14, %s12
  $region1: #{tpu_custom_call.1} parent=0
    #allocation4 [shape = 'u8[4096]{0}', space=vmem, size = 0x1000, scoped, tag = 'output window, operand 0, single buffered']
    #allocation5 [shape = 's32[1]{0}', space=sflag, size = 0x4, scoped, tag = 'scoped memory for tpu_custom_call.1']
    %16 = vsyncpa [#allocation5], 0
    // Predicated region
    $region2: #{tpu_custom_call.1} parent=1 // pred_check
      _
    $region3: #{tpu_custom_call.1} parent=1 // pred_check_branch
      %18 = sbr.rel (0) target = $region5
    $region4: #{tpu_custom_call.1} parent=1 // pred_region
      _
    $region5: #{tpu_custom_call.1} parent=1 // pred_fallthru
      _
    // Predicated region
    $region6: #{tpu_custom_call.1} parent=1 // pred_check
      _
    $region7: #{tpu_custom_call.1} parent=1 // pred_check_branch
      %20 = sbr.rel (0) target = $region9
    $region8: #{tpu_custom_call.1} parent=1 // pred_region
      _
    $region9: #{tpu_custom_call.1} parent=1 // pred_fallthru
      _
    // Predicated region
    $region10: #{tpu_custom_call.1} parent=1 // pred_check
      _
    $region11: #{tpu_custom_call.1} parent=1 // pred_check_branch
      %22 = sbr.rel (0) target = $region13
    $region12: #{tpu_custom_call.1} parent=1 // pred_region
      _
    $region13: #{tpu_custom_call.1} parent=1 // pred_fallthru
      _
    // Predicated region
    $region14: #{tpu_custom_call.1} parent=1 // pred_check
      _
    $region15: #{tpu_custom_call.1} parent=1 // pred_check_branch
      %24 = sbr.rel (0) target = $region17
    $region16: #{tpu_custom_call.1} parent=1 // pred_region
      _
    $region17: #{tpu_custom_call.1} parent=1 // pred_fallthru
      _
    // Predicated region
    $region18: #{tpu_custom_call.1} parent=1 // pred_check
      _
    $region19: #{tpu_custom_call.1} parent=1 // pred_check_branch
      %26 = sbr.rel (0) target = $region21
    $region20: #{tpu_custom_call.1} parent=1 // pred_region
      _
    $region21: #{tpu_custom_call.1} parent=1 // pred_fallthru
      _
    // Predicated region
    $region22: #{tpu_custom_call.1} parent=1 // pred_check
      _
    $region23: #{tpu_custom_call.1} parent=1 // pred_check_branch
      %28 = sbr.rel (0) target = $region25
    $region24: #{tpu_custom_call.1} parent=1 // pred_region
      _
    $region25: #{tpu_custom_call.1} parent=1 // pred_fallthru
      _
    // Predicated region
    $region26: #{tpu_custom_call.1} parent=1 // pred_check
      _
    $region27: #{tpu_custom_call.1} parent=1 // pred_check_branch
      %30 = sbr.rel (0) target = $region29
    $region28: #{tpu_custom_call.1} parent=1 // pred_region
      _
    $region29: #{tpu_custom_call.1} parent=1 // pred_fallthru
      _
    // Predicated region
    $region30: #{tpu_custom_call.1} parent=1 // pred_check
      _
    $region31: #{tpu_custom_call.1} parent=1 // pred_check_branch
      %32 = sbr.rel (0) target = $region33
    $region32: #{tpu_custom_call.1} parent=1 // pred_region
      _
    $region33: #{tpu_custom_call.1} parent=1 // pred_fallthru
      _
    // Predicated region
    $region34: #{tpu_custom_call.1} parent=1 // pred_check
      _
    $region35: #{tpu_custom_call.1} parent=1 // pred_check_branch
      %34 = sbr.rel (0) target = $region37
    $region36: #{tpu_custom_call.1} parent=1 // pred_region
      _
    $region37: #{tpu_custom_call.1} parent=1 // pred_fallthru
      _
    // Predicated region
    $region38: #{tpu_custom_call.1} parent=1 // pred_check
      _
    $region39: #{tpu_custom_call.1} parent=1 // pred_check_branch
      %36 = sbr.rel (0) target = $region41
    $region40: #{tpu_custom_call.1} parent=1 // pred_region
      _
    $region41: #{tpu_custom_call.1} parent=1 // pred_fallthru
      _
    // Predicated region
    $region42: #{tpu_custom_call.1} parent=1 // pred_check
      _
    $region43: #{tpu_custom_call.1} parent=1 // pred_check_branch
      %38 = sbr.rel (0) target = $region45
    $region44: #{tpu_custom_call.1} parent=1 // pred_region
      _
    $region45: #{tpu_custom_call.1} parent=1 // pred_fallthru
      _
    %v39 = vld [vmem:[%s2] sm:$0x3]
    %v40 = vld [vmem:[%s4] sm:$0x1]
    %v41 = vld [vmem:[%s5] sm:$0x1]
    %v42 = vld [vmem:[%s6] sm:$0x1]
    %v43 = vld [vmem:[%s9] sm:$0x3]
    %v44 = vld [vmem:[%s10] sm:$0x1]
    %45 = vst [vmem:[#allocation3] sm:$0xff] 0.0
    %46 = vst [vmem:[#allocation3 + $0x8] sm:$0xff] 0.0
    %v47 = vld [vmem:[%s0] sm:$0xff]
    %v48 = vld [vmem:[%s1] sm:$0xff]
    %v49 = vld [vmem:[%s1 + $0x8] sm:$0xff]
    %v50 = vld [vmem:[%s1 + $0x10] sm:$0xff]
    %v51 = vld [vmem:[%s1 + $0x18] sm:$0xff]
    %v52 = vld [vmem:[%s1 + $0x20] sm:$0xff]
    %v53 = vld [vmem:[%s1 + $0x28] sm:$0xff]
    %v54 = vld [vmem:[%s1 + $0x30] sm:$0xff]
    %v55 = vld [vmem:[%s1 + $0x38] sm:$0xff]
    %v56 = vld [vmem:[%s1 + $0x40] sm:$0xff]
    %v57 = vld [vmem:[%s1 + $0x48] sm:$0xff]
    %v58 = vld [vmem:[%s1 + $0x50] sm:$0xff]
    %v59 = vld [vmem:[%s1 + $0x58] sm:$0xff]
    %v60 = vld [vmem:[%s1 + $0x60] sm:$0xff]
    %v61 = vld [vmem:[%s1 + $0x68] sm:$0xff]
    %v62 = vld [vmem:[%s1 + $0x70] sm:$0xff]
    %v63 = vld [vmem:[%s1 + $0x78] sm:$0xff]
    %v64 = vld [vmem:[%s1 + $0x80] sm:$0xff]
    %v65 = vld [vmem:[%s1 + $0x88] sm:$0xff]
    %v66 = vld [vmem:[%s1 + $0x90] sm:$0xff]
    %v67 = vld [vmem:[%s1 + $0x98] sm:$0xff]
    %v68 = vld [vmem:[%s1 + $0xa0] sm:$0xff]
    %v69 = vld [vmem:[%s1 + $0xa8] sm:$0xff]
    %v70 = vld [vmem:[%s1 + $0xb0] sm:$0xff]
    %v71 = vld [vmem:[%s1 + $0xb8] sm:$0xff]
    %v72 = vld [vmem:[%s1 + $0xc0] sm:$0xff]
    %v73 = vld [vmem:[%s1 + $0xc8] sm:$0xff]
    %v74 = vld [vmem:[%s1 + $0xd0] sm:$0xff]
    %v75 = vld [vmem:[%s1 + $0xd8] sm:$0xff]
    %v76 = vld [vmem:[%s1 + $0xe0] sm:$0xff]
    %v77 = vld [vmem:[%s1 + $0xe8] sm:$0xff]
    %v78 = vld [vmem:[%s1 + $0xf0] sm:$0xff]
    %v79 = vld [vmem:[%s1 + $0xf8] sm:$0xff]
    %v81 = vperm.slane %v39, 0
    %v82 = vperm.slane %v39, 1
    %85 = vmatpush.msra.mxu0 %v78
    %86 = vmatpush.msra.mxu0 %v76
    %87 = vmatpush.msra.mxu0 %v74
    %88 = vmatpush.msra.mxu0 %v72
    %89 = vmatpush.msra.mxu0 %v70
    %90 = vmatpush.msra.mxu0 %v68
    %91 = vmatpush.msra.mxu0 %v66
    %92 = vmatpush.msra.mxu0 %v64
    %93 = vmatpush.msra.mxu0 %v62
    %94 = vmatpush.msra.mxu0 %v60
    %95 = vmatpush.msra.mxu0 %v58
    %96 = vmatpush.msra.mxu0 %v56
    %97 = vmatpush.msra.mxu0 %v54
    %98 = vmatpush.msra.mxu0 %v52
    %99 = vmatpush.msra.mxu0 %v50
    %100 = vmatpush.msra.mxu0 %v48
    %101 = vmatmul.f32.gmra.mxu0 %v47
    %v102 = vpop.f32.mrf.mxu0
    %v103 = vadd.f32 %v81, %v102
    %104 = vdwg.mxu0
    %105 = vmatpush.msra.mxu0 %v79
    %106 = vmatpush.msra.mxu0 %v77
    %107 = vmatpush.msra.mxu0 %v75
    %108 = vmatpush.msra.mxu0 %v73
    %109 = vmatpush.msra.mxu0 %v71
    %110 = vmatpush.msra.mxu0 %v69
    %111 = vmatpush.msra.mxu0 %v67
    %112 = vmatpush.msra.mxu0 %v65
    %113 = vmatpush.msra.mxu0 %v63
    %114 = vmatpush.msra.mxu0 %v61
    %115 = vmatpush.msra.mxu0 %v59
    %116 = vmatpush.msra.mxu0 %v57
    %117 = vmatpush.msra.mxu0 %v55
    %118 = vmatpush.msra.mxu0 %v53
    %119 = vmatpush.msra.mxu0 %v51
    %120 = vmatpush.msra.mxu0 %v49
    %121 = vmatmul.f32.gmra.mxu0 %v47
    %v122 = vpop.f32.mrf.mxu0
    %v123 = vadd.f32 %v82, %v122
    %124 = vdwg.mxu0
    %v125 = vmul.f32 %v103, 0.01
    %v126 = vmul.f32 %v123, 0.01
    %v127 = vmax.f32 %v103, %v125
    %v128 = vmax.f32 %v123, %v126
    %v129 = vld [vmem:[%s3] sm:$0xff]
    %v130 = vld [vmem:[%s3 + $0x8] sm:$0xff]
    %v131 = vld [vmem:[%s3 + $0x10] sm:$0xff]
    %v132 = vld [vmem:[%s3 + $0x18] sm:$0xff]
    %v133 = vld [vmem:[%s3 + $0x20] sm:$0xff]
    %v134 = vld [vmem:[%s3 + $0x28] sm:$0xff]
    %v135 = vld [vmem:[%s3 + $0x30] sm:$0xff]
    %v136 = vld [vmem:[%s3 + $0x38] sm:$0xff]
    %v137 = vld [vmem:[%s3 + $0x40] sm:$0xff]
    %v138 = vld [vmem:[%s3 + $0x48] sm:$0xff]
    %v139 = vld [vmem:[%s3 + $0x50] sm:$0xff]
    %v140 = vld [vmem:[%s3 + $0x58] sm:$0xff]
    %v141 = vld [vmem:[%s3 + $0x60] sm:$0xff]
    %v142 = vld [vmem:[%s3 + $0x68] sm:$0xff]
    %v143 = vld [vmem:[%s3 + $0x70] sm:$0xff]
    %v144 = vld [vmem:[%s3 + $0x78] sm:$0xff]
    %v145 = vld [vmem:[%s3 + $0x80] sm:$0xff]
    %v146 = vld [vmem:[%s3 + $0x88] sm:$0xff]
    %v147 = vld [vmem:[%s3 + $0x90] sm:$0xff]
    %v148 = vld [vmem:[%s3 + $0x98] sm:$0xff]
    %v149 = vld [vmem:[%s3 + $0xa0] sm:$0xff]
    %v150 = vld [vmem:[%s3 + $0xa8] sm:$0xff]
    %v151 = vld [vmem:[%s3 + $0xb0] sm:$0xff]
    %v152 = vld [vmem:[%s3 + $0xb8] sm:$0xff]
    %v153 = vld [vmem:[%s3 + $0xc0] sm:$0xff]
    %v154 = vld [vmem:[%s3 + $0xc8] sm:$0xff]
    %v155 = vld [vmem:[%s3 + $0xd0] sm:$0xff]
    %v156 = vld [vmem:[%s3 + $0xd8] sm:$0xff]
    %v157 = vld [vmem:[%s3 + $0xe0] sm:$0xff]
    %v158 = vld [vmem:[%s3 + $0xe8] sm:$0xff]
    %v159 = vld [vmem:[%s3 + $0xf0] sm:$0xff]
    %v160 = vld [vmem:[%s3 + $0xf8] sm:$0xff]
    %v162 = vperm.slane %v40, 0
    %164 = vmatpush.msra.mxu0 %v144
    %165 = vmatpush.msra.mxu0 %v143
    %166 = vmatpush.msra.mxu0 %v142
    %167 = vmatpush.msra.mxu0 %v141
    %168 = vmatpush.msra.mxu0 %v140
    %169 = vmatpush.msra.mxu0 %v139
    %170 = vmatpush.msra.mxu0 %v138
    %171 = vmatpush.msra.mxu0 %v137
    %172 = vmatpush.msra.mxu0 %v136
    %173 = vmatpush.msra.mxu0 %v135
    %174 = vmatpush.msra.mxu0 %v134
    %175 = vmatpush.msra.mxu0 %v133
    %176 = vmatpush.msra.mxu0 %v132
    %177 = vmatpush.msra.mxu0 %v131
    %178 = vmatpush.msra.mxu0 %v130
    %179 = vmatpush.msra.mxu0 %v129
    %180 = vmatmul.f32.gmra.mxu0 %v127
    %v181 = vpop.f32.mrf.mxu0
    %v182 = vadd.f32 %v162, %v181
    %183 = vdwg.mxu0
    %184 = vmatpush.msra.mxu0 %v160
    %185 = vmatpush.msra.mxu0 %v159
    %186 = vmatpush.msra.mxu0 %v158
    %187 = vmatpush.msra.mxu0 %v157
    %188 = vmatpush.msra.mxu0 %v156
    %189 = vmatpush.msra.mxu0 %v155
    %190 = vmatpush.msra.mxu0 %v154
    %191 = vmatpush.msra.mxu0 %v153
    %192 = vmatpush.msra.mxu0 %v152
    %193 = vmatpush.msra.mxu0 %v151
    %194 = vmatpush.msra.mxu0 %v150
    %195 = vmatpush.msra.mxu0 %v149
    %196 = vmatpush.msra.mxu0 %v148
    %197 = vmatpush.msra.mxu0 %v147
    %198 = vmatpush.msra.mxu0 %v146
    %199 = vmatpush.msra.mxu0 %v145
    %200 = vmatmul.f32.gmra.mxu0 %v128
    %v201 = vpop.f32.mrf.mxu0
    %v202 = vadd.f32 %v182, %v201
    %203 = vdwg.mxu0
    %vm204 = vcmask 261120
    %v205 = vsel %vm204, %v202, 0.0
    %206 = vadd.xlane.f32.xlu0 %v205
    %v207 = vpop.xlane.xlu0 %206
    %v208 = vrcp.pop 32.0
    %v209 = vmul.f32 32.0, %v208
    %v210 = vsub.f32 1.0, %v209
    %v211 = vmul.f32 %v208, %v210
    %v212 = vadd.f32 %v208, %v211
    %vm213 = vweird.f32 %v208
    %v214 = vsel %vm213, %v208, %v212
    %v215 = vmul.f32 %v207, %v214
    %v216 = vsub.f32 %v202, %v215
    %v217 = vmul.f32 %v216, %v216
    %v218 = vsel %vm204, %v217, 0.0
    %219 = vadd.xlane.f32.xlu0 %v218
    %v220 = vpop.xlane.xlu0 %219
    %v221 = vmul.f32 %v220, %v214
    %v222 = vadd.f32 %v221, 1e-05
    %v223 = vrsqrt.pop %v222
    %v224 = vmul.f32 %v223, %v222
    %v225 = vmul.f32 %v224, %v223
    %v226 = vmul.f32 0.5, %v225
    %v227 = vsub.f32 1.5, %v226
    %v228 = vmul.f32 %v223, %v227
    %vm229 = vweird.f32 %v222
    %vm230 = vweird.f32 %v223
    %vm231 = vmor %vm229, %vm230
    %v232 = vsel %vm231, %v223, %v228
    %v233 = vmul.f32 %v216, %v232
    %v235 = vperm.slane %v41, 0
    %v237 = vmul.f32 %v233, %v235
    %v239 = vperm.slane %v42, 0
    %v241 = vadd.f32 %v237, %v239
    %v242 = vld [vmem:[%s7] sm:$0xff]
    %v243 = vld [vmem:[%s7 + $0x8] sm:$0xff]
    %v244 = vld [vmem:[%s7 + $0x10] sm:$0xff]
    %v245 = vld [vmem:[%s7 + $0x18] sm:$0xff]
    %v246 = vld [vmem:[%s7 + $0x20] sm:$0xff]
    %v247 = vld [vmem:[%s7 + $0x28] sm:$0xff]
    %v248 = vld [vmem:[%s7 + $0x30] sm:$0xff]
    %v249 = vld [vmem:[%s7 + $0x38] sm:$0xff]
    %v251 = vsel %vm204, %v241, 0
    %253 = vmatpush.msra.mxu0 0.0
    %254 = vmatpush.msra.mxu0 0.0
    %255 = vmatpush.msra.mxu0 0.0
    %256 = vmatpush.msra.mxu0 0.0
    %257 = vmatpush.msra.mxu0 0.0
    %258 = vmatpush.msra.mxu0 0.0
    %259 = vmatpush.msra.mxu0 0.0
    %260 = vmatpush.msra.mxu0 0.0
    %261 = vmatpush.msra.mxu0 0.0
    %262 = vmatpush.msra.mxu0 0.0
    %263 = vmatpush.msra.mxu0 0.0
    %264 = vmatpush.msra.mxu0 0.0
    %265 = vmatpush.msra.mxu0 %v248
    %266 = vmatpush.msra.mxu0 %v246
    %267 = vmatpush.msra.mxu0 %v244
    %268 = vmatpush.msra.mxu0 %v242
    %269 = vmatmul.f32.gmra.mxu0 %v251
    %v270 = vpop.f32.mrf.mxu0
    %v271 = vadd.f32 0.0, %v270
    %272 = vdwg.mxu0
    %273 = vmatpush.msra.mxu0 0.0
    %274 = vmatpush.msra.mxu0 0.0
    %275 = vmatpush.msra.mxu0 0.0
    %276 = vmatpush.msra.mxu0 0.0
    %277 = vmatpush.msra.mxu0 0.0
    %278 = vmatpush.msra.mxu0 0.0
    %279 = vmatpush.msra.mxu0 0.0
    %280 = vmatpush.msra.mxu0 0.0
    %281 = vmatpush.msra.mxu0 0.0
    %282 = vmatpush.msra.mxu0 0.0
    %283 = vmatpush.msra.mxu0 0.0
    %284 = vmatpush.msra.mxu0 0.0
    %285 = vmatpush.msra.mxu0 %v249
    %286 = vmatpush.msra.mxu0 %v247
    %287 = vmatpush.msra.mxu0 %v245
    %288 = vmatpush.msra.mxu0 %v243
    %289 = vmatmul.f32.gmra.mxu0 %v251
    %v290 = vpop.f32.mrf.mxu0
    %v291 = vadd.f32 0.0, %v290
    %292 = vdwg.mxu0
    %293 = vst [vmem:[#allocation3] sm:$0xff] %v271
    %295 = vrot.lane.b32.xlu0 %v291, 96
    %v296 = vpop.permute.xlu0 %295
    %298 = vst.msk [vmem:[#allocation2] sm:$0xff] %vm204, %v296
    %v299 = vlaneseq
    %v300 = vshrl.u32 %v299, 7
    %v301 = vadd.s32 %v300, 8
    %v302 = vld [vmem:[#allocation2] sm:$0xff]
    %v303 = vld [vmem:[#allocation2 + $0x8] sm:$0xff]
    %v304 = vperm.slane %v291, 7
    %v305 = vmul.f32 %v302, %v304
    %v306 = vmul.f32 %v303, %v304
    %v307 = vsel %vm204, %v305, 0.0
    %308 = vadd.xlane.f32.xlu0 %v307
    %v309 = vpop.xlane.xlu0 %308
    %v310 = vsel %vm204, %v306, 0.0
    %311 = vadd.xlane.f32.xlu0 %v310
    %v312 = vpop.xlane.xlu0 %311
    %vm313 = vcmp.lt.s32.totalorder %v300, 8
    %vm314 = vcmp.lt.s32.totalorder %v301, 8
    %v315 = vsel %vm313, %v309, -1e+30
    %v316 = vsel %vm314, %v312, -1e+30
    %v317 = vmax.f32 %v315, %v316
    %v318 = vrot.slane %v317, 4
    %v319 = vmax.f32 %v317, %v318
    %v320 = vrot.slane %v319, 2
    %v321 = vmax.f32 %v319, %v320
    %v322 = vrot.slane %v321, 1
    %v323 = vmax.f32 %v321, %v322
    %v324 = vsub.f32 %v315, %v323
    %v325 = vsub.f32 %v316, %v323
    %v326 = vmul.f32 %v324, 1.442695
    %v327 = vpow.pop %v326
    %v328 = vmul.f32 %v325, 1.442695
    %v329 = vpow.pop %v328
    %v330 = vadd.f32 %v327, %v329
    %v331 = vrot.slane %v330, 4
    %v332 = vadd.f32 %v330, %v331
    %v333 = vrot.slane %v332, 2
    %v334 = vadd.f32 %v332, %v333
    %v335 = vrot.slane %v334, 1
    %v336 = vadd.f32 %v334, %v335
    %v337 = vrcp.pop %v336
    %v338 = vmul.f32 %v336, %v337
    %v339 = vsub.f32 1.0, %v338
    %v340 = vmul.f32 %v337, %v339
    %v341 = vadd.f32 %v337, %v340
    %vm342 = vweird.f32 %v336
    %vm343 = vweird.f32 %v337
    %vm344 = vmor %vm342, %vm343
    %v345 = vsel %vm344, %v337, %v341
    %v346 = vand.u32 2147483647, %v336
    %vm347 = vcmp.eq.f32.partialorder %v346, 8.507059e+37
    %v348 = vand.u32 %v336, 2147483648
    %v349 = vor.u32 1.1754944e-38, %v348
    %v350 = vsel %vm347, %v349, %v345
    %v351 = vmul.f32 %v327, %v350
    %v352 = vmul.f32 %v329, %v350
    %v353 = vld [vmem:[#allocation3] sm:$0xff]
    %v354 = vld [vmem:[#allocation3 + $0x8] sm:$0xff]
    %v355 = vmul.f32 %v351, %v353
    %v356 = vmul.f32 %v352, %v354
    %v357 = vadd.f32 %v355, %v356
    %v358 = vrot.slane %v357, 4
    %v359 = vadd.f32 %v357, %v358
    %v360 = vrot.slane %v359, 2
    %v361 = vadd.f32 %v359, %v360
    %v362 = vrot.slane %v361, 1
    %v363 = vadd.f32 %v361, %v362
    %v364 = vadd.f32 %v363, %v44
    %365 = vst [vmem:[#allocation4] sm:$0x1] %v364
    %v366 = vld [vmem:[%s1] sm:$0xff]
    %v367 = vld [vmem:[%s1 + $0x8] sm:$0xff]
    %v368 = vld [vmem:[%s1 + $0x10] sm:$0xff]
    %v369 = vld [vmem:[%s1 + $0x18] sm:$0xff]
    %v370 = vld [vmem:[%s1 + $0x20] sm:$0xff]
    %v371 = vld [vmem:[%s1 + $0x28] sm:$0xff]
    %v372 = vld [vmem:[%s1 + $0x30] sm:$0xff]
    %v373 = vld [vmem:[%s1 + $0x38] sm:$0xff]
    %v374 = vld [vmem:[%s1 + $0x40] sm:$0xff]
    %v375 = vld [vmem:[%s1 + $0x48] sm:$0xff]
    %v376 = vld [vmem:[%s1 + $0x50] sm:$0xff]
    %v377 = vld [vmem:[%s1 + $0x58] sm:$0xff]
    %v378 = vld [vmem:[%s1 + $0x60] sm:$0xff]
    %v379 = vld [vmem:[%s1 + $0x68] sm:$0xff]
    %v380 = vld [vmem:[%s1 + $0x70] sm:$0xff]
    %v381 = vld [vmem:[%s1 + $0x78] sm:$0xff]
    %v382 = vld [vmem:[%s1 + $0x80] sm:$0xff]
    %v383 = vld [vmem:[%s1 + $0x88] sm:$0xff]
    %v384 = vld [vmem:[%s1 + $0x90] sm:$0xff]
    %v385 = vld [vmem:[%s1 + $0x98] sm:$0xff]
    %v386 = vld [vmem:[%s1 + $0xa0] sm:$0xff]
    %v387 = vld [vmem:[%s1 + $0xa8] sm:$0xff]
    %v388 = vld [vmem:[%s1 + $0xb0] sm:$0xff]
    %v389 = vld [vmem:[%s1 + $0xb8] sm:$0xff]
    %v390 = vld [vmem:[%s1 + $0xc0] sm:$0xff]
    %v391 = vld [vmem:[%s1 + $0xc8] sm:$0xff]
    %v392 = vld [vmem:[%s1 + $0xd0] sm:$0xff]
    %v393 = vld [vmem:[%s1 + $0xd8] sm:$0xff]
    %v394 = vld [vmem:[%s1 + $0xe0] sm:$0xff]
    %v395 = vld [vmem:[%s1 + $0xe8] sm:$0xff]
    %v396 = vld [vmem:[%s1 + $0xf0] sm:$0xff]
    %v397 = vld [vmem:[%s1 + $0xf8] sm:$0xff]
    %398 = vmatpush.msra.mxu0 %v396
    %399 = vmatpush.msra.mxu0 %v394
    %400 = vmatpush.msra.mxu0 %v392
    %401 = vmatpush.msra.mxu0 %v390
    %402 = vmatpush.msra.mxu0 %v388
    %403 = vmatpush.msra.mxu0 %v386
    %404 = vmatpush.msra.mxu0 %v384
    %405 = vmatpush.msra.mxu0 %v382
    %406 = vmatpush.msra.mxu0 %v380
    %407 = vmatpush.msra.mxu0 %v378
    %408 = vmatpush.msra.mxu0 %v376
    %409 = vmatpush.msra.mxu0 %v374
    %410 = vmatpush.msra.mxu0 %v372
    %411 = vmatpush.msra.mxu0 %v370
    %412 = vmatpush.msra.mxu0 %v368
    %413 = vmatpush.msra.mxu0 %v366
    %414 = vmatmul.f32.gmra.mxu0 %v364
    %v415 = vpop.f32.mrf.mxu0
    %v416 = vadd.f32 %v81, %v415
    %417 = vdwg.mxu0
    %418 = vmatpush.msra.mxu0 %v397
    %419 = vmatpush.msra.mxu0 %v395
    %420 = vmatpush.msra.mxu0 %v393
    %421 = vmatpush.msra.mxu0 %v391
    %422 = vmatpush.msra.mxu0 %v389
    %423 = vmatpush.msra.mxu0 %v387
    %424 = vmatpush.msra.mxu0 %v385
    %425 = vmatpush.msra.mxu0 %v383
    %426 = vmatpush.msra.mxu0 %v381
    %427 = vmatpush.msra.mxu0 %v379
    %428 = vmatpush.msra.mxu0 %v377
    %429 = vmatpush.msra.mxu0 %v375
    %430 = vmatpush.msra.mxu0 %v373
    %431 = vmatpush.msra.mxu0 %v371
    %432 = vmatpush.msra.mxu0 %v369
    %433 = vmatpush.msra.mxu0 %v367
    %434 = vmatmul.f32.gmra.mxu0 %v364
    %v435 = vpop.f32.mrf.mxu0
    %v436 = vadd.f32 %v82, %v435
    %437 = vdwg.mxu0
    %v438 = vmul.f32 %v416, 0.01
    %v439 = vmul.f32 %v436, 0.01
    %v440 = vmax.f32 %v416, %v438
    %v441 = vmax.f32 %v436, %v439
    %v442 = vld [vmem:[%s8] sm:$0xff]
    %v443 = vld [vmem:[%s8 + $0x8] sm:$0xff]
    %v444 = vld [vmem:[%s8 + $0x10] sm:$0xff]
    %v445 = vld [vmem:[%s8 + $0x18] sm:$0xff]
    %v446 = vld [vmem:[%s8 + $0x20] sm:$0xff]
    %v447 = vld [vmem:[%s8 + $0x28] sm:$0xff]
    %v448 = vld [vmem:[%s8 + $0x30] sm:$0xff]
    %v449 = vld [vmem:[%s8 + $0x38] sm:$0xff]
    %v450 = vld [vmem:[%s8 + $0x40] sm:$0xff]
    %v451 = vld [vmem:[%s8 + $0x48] sm:$0xff]
    %v452 = vld [vmem:[%s8 + $0x50] sm:$0xff]
    %v453 = vld [vmem:[%s8 + $0x58] sm:$0xff]
    %v454 = vld [vmem:[%s8 + $0x60] sm:$0xff]
    %v455 = vld [vmem:[%s8 + $0x68] sm:$0xff]
    %v456 = vld [vmem:[%s8 + $0x70] sm:$0xff]
    %v457 = vld [vmem:[%s8 + $0x78] sm:$0xff]
    %v458 = vld [vmem:[%s8 + $0x80] sm:$0xff]
    %v459 = vld [vmem:[%s8 + $0x88] sm:$0xff]
    %v460 = vld [vmem:[%s8 + $0x90] sm:$0xff]
    %v461 = vld [vmem:[%s8 + $0x98] sm:$0xff]
    %v462 = vld [vmem:[%s8 + $0xa0] sm:$0xff]
    %v463 = vld [vmem:[%s8 + $0xa8] sm:$0xff]
    %v464 = vld [vmem:[%s8 + $0xb0] sm:$0xff]
    %v465 = vld [vmem:[%s8 + $0xb8] sm:$0xff]
    %v466 = vld [vmem:[%s8 + $0xc0] sm:$0xff]
    %v467 = vld [vmem:[%s8 + $0xc8] sm:$0xff]
    %v468 = vld [vmem:[%s8 + $0xd0] sm:$0xff]
    %v469 = vld [vmem:[%s8 + $0xd8] sm:$0xff]
    %v470 = vld [vmem:[%s8 + $0xe0] sm:$0xff]
    %v471 = vld [vmem:[%s8 + $0xe8] sm:$0xff]
    %v472 = vld [vmem:[%s8 + $0xf0] sm:$0xff]
    %v473 = vld [vmem:[%s8 + $0xf8] sm:$0xff]
    %v474 = vld [vmem:[%s8 + $0x100] sm:$0xff]
    %v475 = vld [vmem:[%s8 + $0x108] sm:$0xff]
    %v476 = vld [vmem:[%s8 + $0x110] sm:$0xff]
    %v477 = vld [vmem:[%s8 + $0x118] sm:$0xff]
    %v478 = vld [vmem:[%s8 + $0x120] sm:$0xff]
    %v479 = vld [vmem:[%s8 + $0x128] sm:$0xff]
    %v480 = vld [vmem:[%s8 + $0x130] sm:$0xff]
    %v481 = vld [vmem:[%s8 + $0x138] sm:$0xff]
    %v482 = vld [vmem:[%s8 + $0x140] sm:$0xff]
    %v483 = vld [vmem:[%s8 + $0x148] sm:$0xff]
    %v484 = vld [vmem:[%s8 + $0x150] sm:$0xff]
    %v485 = vld [vmem:[%s8 + $0x158] sm:$0xff]
    %v486 = vld [vmem:[%s8 + $0x160] sm:$0xff]
    %v487 = vld [vmem:[%s8 + $0x168] sm:$0xff]
    %v488 = vld [vmem:[%s8 + $0x170] sm:$0xff]
    %v489 = vld [vmem:[%s8 + $0x178] sm:$0xff]
    %v490 = vld [vmem:[%s8 + $0x180] sm:$0xff]
    %v491 = vld [vmem:[%s8 + $0x188] sm:$0xff]
    %v492 = vld [vmem:[%s8 + $0x190] sm:$0xff]
    %v493 = vld [vmem:[%s8 + $0x198] sm:$0xff]
    %v494 = vld [vmem:[%s8 + $0x1a0] sm:$0xff]
    %v495 = vld [vmem:[%s8 + $0x1a8] sm:$0xff]
    %v496 = vld [vmem:[%s8 + $0x1b0] sm:$0xff]
    %v497 = vld [vmem:[%s8 + $0x1b8] sm:$0xff]
    %v498 = vld [vmem:[%s8 + $0x1c0] sm:$0xff]
    %v499 = vld [vmem:[%s8 + $0x1c8] sm:$0xff]
    %v500 = vld [vmem:[%s8 + $0x1d0] sm:$0xff]
    %v501 = vld [vmem:[%s8 + $0x1d8] sm:$0xff]
    %v502 = vld [vmem:[%s8 + $0x1e0] sm:$0xff]
    %v503 = vld [vmem:[%s8 + $0x1e8] sm:$0xff]
    %v504 = vld [vmem:[%s8 + $0x1f0] sm:$0xff]
    %v505 = vld [vmem:[%s8 + $0x1f8] sm:$0xff]
    %v507 = vperm.slane %v43, 0
    %v508 = vperm.slane %v43, 1
    %511 = vmatpush.msra.mxu0 %v472
    %512 = vmatpush.msra.mxu0 %v470
    %513 = vmatpush.msra.mxu0 %v468
    %514 = vmatpush.msra.mxu0 %v466
    %515 = vmatpush.msra.mxu0 %v464
    %516 = vmatpush.msra.mxu0 %v462
    %517 = vmatpush.msra.mxu0 %v460
    %518 = vmatpush.msra.mxu0 %v458
    %519 = vmatpush.msra.mxu0 %v456
    %520 = vmatpush.msra.mxu0 %v454
    %521 = vmatpush.msra.mxu0 %v452
    %522 = vmatpush.msra.mxu0 %v450
    %523 = vmatpush.msra.mxu0 %v448
    %524 = vmatpush.msra.mxu0 %v446
    %525 = vmatpush.msra.mxu0 %v444
    %526 = vmatpush.msra.mxu0 %v442
    %527 = vmatmul.f32.gmra.mxu0 %v440
    %v528 = vpop.f32.mrf.mxu0
    %v529 = vadd.f32 %v507, %v528
    %530 = vdwg.mxu0
    %531 = vmatpush.msra.mxu0 %v504
    %532 = vmatpush.msra.mxu0 %v502
    %533 = vmatpush.msra.mxu0 %v500
    %534 = vmatpush.msra.mxu0 %v498
    %535 = vmatpush.msra.mxu0 %v496
    %536 = vmatpush.msra.mxu0 %v494
    %537 = vmatpush.msra.mxu0 %v492
    %538 = vmatpush.msra.mxu0 %v490
    %539 = vmatpush.msra.mxu0 %v488
    %540 = vmatpush.msra.mxu0 %v486
    %541 = vmatpush.msra.mxu0 %v484
    %542 = vmatpush.msra.mxu0 %v482
    %543 = vmatpush.msra.mxu0 %v480
    %544 = vmatpush.msra.mxu0 %v478
    %545 = vmatpush.msra.mxu0 %v476
    %546 = vmatpush.msra.mxu0 %v474
    %547 = vmatmul.f32.gmra.mxu0 %v441
    %v548 = vpop.f32.mrf.mxu0
    %v549 = vadd.f32 %v529, %v548
    %550 = vdwg.mxu0
    %551 = vmatpush.msra.mxu0 %v473
    %552 = vmatpush.msra.mxu0 %v471
    %553 = vmatpush.msra.mxu0 %v469
    %554 = vmatpush.msra.mxu0 %v467
    %555 = vmatpush.msra.mxu0 %v465
    %556 = vmatpush.msra.mxu0 %v463
    %557 = vmatpush.msra.mxu0 %v461
    %558 = vmatpush.msra.mxu0 %v459
    %559 = vmatpush.msra.mxu0 %v457
    %560 = vmatpush.msra.mxu0 %v455
    %561 = vmatpush.msra.mxu0 %v453
    %562 = vmatpush.msra.mxu0 %v451
    %563 = vmatpush.msra.mxu0 %v449
    %564 = vmatpush.msra.mxu0 %v447
    %565 = vmatpush.msra.mxu0 %v445
    %566 = vmatpush.msra.mxu0 %v443
    %567 = vmatmul.f32.gmra.mxu0 %v440
    %v568 = vpop.f32.mrf.mxu0
    %v569 = vadd.f32 %v508, %v568
    %570 = vdwg.mxu0
    %571 = vmatpush.msra.mxu0 %v505
    %572 = vmatpush.msra.mxu0 %v503
    %573 = vmatpush.msra.mxu0 %v501
    %574 = vmatpush.msra.mxu0 %v499
    %575 = vmatpush.msra.mxu0 %v497
    %576 = vmatpush.msra.mxu0 %v495
    %577 = vmatpush.msra.mxu0 %v493
    %578 = vmatpush.msra.mxu0 %v491
    %579 = vmatpush.msra.mxu0 %v489
    %580 = vmatpush.msra.mxu0 %v487
    %581 = vmatpush.msra.mxu0 %v485
    %582 = vmatpush.msra.mxu0 %v483
    %583 = vmatpush.msra.mxu0 %v481
    %584 = vmatpush.msra.mxu0 %v479
    %585 = vmatpush.msra.mxu0 %v477
    %586 = vmatpush.msra.mxu0 %v475
    %587 = vmatmul.f32.gmra.mxu0 %v441
    %v588 = vpop.f32.mrf.mxu0
    %v589 = vadd.f32 %v569, %v588
    %590 = vdwg.mxu0
    %591 = vst [vmem:[#allocation3 + $0x8] sm:$0x1] %v549
    %593 = vrot.lane.b32.xlu0 %v589, 96
    %v594 = vpop.permute.xlu0 %593
    %vm596 = vcmask 253952
    %597 = vst.msk [vmem:[#allocation2 + $0x8] sm:$0x1] %vm596, %v594
    %v598 = vld [vmem:[#allocation2] sm:$0xff]
    %v599 = vld [vmem:[#allocation2 + $0x8] sm:$0xff]
    %v600 = vperm.slane %v589, 0
    %v601 = vmul.f32 %v598, %v600
    %v602 = vmul.f32 %v599, %v600
    %v603 = vsel %vm204, %v601, 0.0
    %604 = vadd.xlane.f32.xlu0 %v603
    %v605 = vpop.xlane.xlu0 %604
    %v606 = vsel %vm204, %v602, 0.0
    %607 = vadd.xlane.f32.xlu0 %v606
    %v608 = vpop.xlane.xlu0 %607
    %vm609 = vcmp.lt.s32.totalorder %v300, 9
    %vm610 = vcmp.lt.s32.totalorder %v301, 9
    %v611 = vsel %vm609, %v605, -1e+30
    %v612 = vsel %vm610, %v608, -1e+30
    %v613 = vmax.f32 %v611, %v612
    %v614 = vrot.slane %v613, 4
    %v615 = vmax.f32 %v613, %v614
    %v616 = vrot.slane %v615, 2
    %v617 = vmax.f32 %v615, %v616
    %v618 = vrot.slane %v617, 1
    %v619 = vmax.f32 %v617, %v618
    %v620 = vsub.f32 %v611, %v619
    %v621 = vsub.f32 %v612, %v619
    %v622 = vmul.f32 %v620, 1.442695
    %v623 = vpow.pop %v622
    %v624 = vmul.f32 %v621, 1.442695
    %v625 = vpow.pop %v624
    %v626 = vadd.f32 %v623, %v625
    %v627 = vrot.slane %v626, 4
    %v628 = vadd.f32 %v626, %v627
    %v629 = vrot.slane %v628, 2
    %v630 = vadd.f32 %v628, %v629
    %v631 = vrot.slane %v630, 1
    %v632 = vadd.f32 %v630, %v631
    %v633 = vrcp.pop %v632
    %v634 = vmul.f32 %v632, %v633
    %v635 = vsub.f32 1.0, %v634
    %v636 = vmul.f32 %v633, %v635
    %v637 = vadd.f32 %v633, %v636
    %vm638 = vweird.f32 %v632
    %vm639 = vweird.f32 %v633
    %vm640 = vmor %vm638, %vm639
    %v641 = vsel %vm640, %v633, %v637
    %v642 = vand.u32 2147483647, %v632
    %vm643 = vcmp.eq.f32.partialorder %v642, 8.507059e+37
    %v644 = vand.u32 %v632, 2147483648
    %v645 = vor.u32 1.1754944e-38, %v644
    %v646 = vsel %vm643, %v645, %v641
    %v647 = vmul.f32 %v623, %v646
    %v648 = vmul.f32 %v625, %v646
    %v649 = vld [vmem:[#allocation3] sm:$0xff]
    %v650 = vld [vmem:[#allocation3 + $0x8] sm:$0xff]
    %v651 = vmul.f32 %v647, %v649
    %v652 = vmul.f32 %v648, %v650
    %v653 = vadd.f32 %v651, %v652
    %v654 = vrot.slane %v653, 4
    %v655 = vadd.f32 %v653, %v654
    %v656 = vrot.slane %v655, 2
    %v657 = vadd.f32 %v655, %v656
    %v658 = vrot.slane %v657, 1
    %v659 = vadd.f32 %v657, %v658
    %v660 = vadd.f32 %v659, %v44
    %661 = vst [vmem:[#allocation4 + $0x1] sm:$0x1] %v660
    %v662 = vld [vmem:[%s1] sm:$0xff]
    %v663 = vld [vmem:[%s1 + $0x8] sm:$0xff]
    %v664 = vld [vmem:[%s1 + $0x10] sm:$0xff]
    %v665 = vld [vmem:[%s1 + $0x18] sm:$0xff]
    %v666 = vld [vmem:[%s1 + $0x20] sm:$0xff]
    %v667 = vld [vmem:[%s1 + $0x28] sm:$0xff]
    %v668 = vld [vmem:[%s1 + $0x30] sm:$0xff]
    %v669 = vld [vmem:[%s1 + $0x38] sm:$0xff]
    %v670 = vld [vmem:[%s1 + $0x40] sm:$0xff]
    %v671 = vld [vmem:[%s1 + $0x48] sm:$0xff]
    %v672 = vld [vmem:[%s1 + $0x50] sm:$0xff]
    %v673 = vld [vmem:[%s1 + $0x58] sm:$0xff]
    %v674 = vld [vmem:[%s1 + $0x60] sm:$0xff]
    %v675 = vld [vmem:[%s1 + $0x68] sm:$0xff]
    %v676 = vld [vmem:[%s1 + $0x70] sm:$0xff]
    %v677 = vld [vmem:[%s1 + $0x78] sm:$0xff]
    %v678 = vld [vmem:[%s1 + $0x80] sm:$0xff]
    %v679 = vld [vmem:[%s1 + $0x88] sm:$0xff]
    %v680 = vld [vmem:[%s1 + $0x90] sm:$0xff]
    %v681 = vld [vmem:[%s1 + $0x98] sm:$0xff]
    %v682 = vld [vmem:[%s1 + $0xa0] sm:$0xff]
    %v683 = vld [vmem:[%s1 + $0xa8] sm:$0xff]
    %v684 = vld [vmem:[%s1 + $0xb0] sm:$0xff]
    %v685 = vld [vmem:[%s1 + $0xb8] sm:$0xff]
    %v686 = vld [vmem:[%s1 + $0xc0] sm:$0xff]
    %v687 = vld [vmem:[%s1 + $0xc8] sm:$0xff]
    %v688 = vld [vmem:[%s1 + $0xd0] sm:$0xff]
    %v689 = vld [vmem:[%s1 + $0xd8] sm:$0xff]
    %v690 = vld [vmem:[%s1 + $0xe0] sm:$0xff]
    %v691 = vld [vmem:[%s1 + $0xe8] sm:$0xff]
    %v692 = vld [vmem:[%s1 + $0xf0] sm:$0xff]
    %v693 = vld [vmem:[%s1 + $0xf8] sm:$0xff]
    %694 = vmatpush.msra.mxu0 %v692
    %695 = vmatpush.msra.mxu0 %v690
    %696 = vmatpush.msra.mxu0 %v688
    %697 = vmatpush.msra.mxu0 %v686
    %698 = vmatpush.msra.mxu0 %v684
    %699 = vmatpush.msra.mxu0 %v682
    %700 = vmatpush.msra.mxu0 %v680
    %701 = vmatpush.msra.mxu0 %v678
    %702 = vmatpush.msra.mxu0 %v676
    %703 = vmatpush.msra.mxu0 %v674
    %704 = vmatpush.msra.mxu0 %v672
    %705 = vmatpush.msra.mxu0 %v670
    %706 = vmatpush.msra.mxu0 %v668
    %707 = vmatpush.msra.mxu0 %v666
    %708 = vmatpush.msra.mxu0 %v664
    %709 = vmatpush.msra.mxu0 %v662
    %710 = vmatmul.f32.gmra.mxu0 %v660
    %v711 = vpop.f32.mrf.mxu0
    %v712 = vadd.f32 %v81, %v711
    %713 = vdwg.mxu0
    %714 = vmatpush.msra.mxu0 %v693
    %715 = vmatpush.msra.mxu0 %v691
    %716 = vmatpush.msra.mxu0 %v689
    %717 = vmatpush.msra.mxu0 %v687
    %718 = vmatpush.msra.mxu0 %v685
    %719 = vmatpush.msra.mxu0 %v683
    %720 = vmatpush.msra.mxu0 %v681
    %721 = vmatpush.msra.mxu0 %v679
    %722 = vmatpush.msra.mxu0 %v677
    %723 = vmatpush.msra.mxu0 %v675
    %724 = vmatpush.msra.mxu0 %v673
    %725 = vmatpush.msra.mxu0 %v671
    %726 = vmatpush.msra.mxu0 %v669
    %727 = vmatpush.msra.mxu0 %v667
    %728 = vmatpush.msra.mxu0 %v665
    %729 = vmatpush.msra.mxu0 %v663
    %730 = vmatmul.f32.gmra.mxu0 %v660
    %v731 = vpop.f32.mrf.mxu0
    %v732 = vadd.f32 %v82, %v731
    %733 = vdwg.mxu0
    %v734 = vmul.f32 %v712, 0.01
    %v735 = vmul.f32 %v732, 0.01
    %v736 = vmax.f32 %v712, %v734
    %v737 = vmax.f32 %v732, %v735
    %v738 = vld [vmem:[%s8] sm:$0xff]
    %v739 = vld [vmem:[%s8 + $0x8] sm:$0xff]
    %v740 = vld [vmem:[%s8 + $0x10] sm:$0xff]
    %v741 = vld [vmem:[%s8 + $0x18] sm:$0xff]
    %v742 = vld [vmem:[%s8 + $0x20] sm:$0xff]
    %v743 = vld [vmem:[%s8 + $0x28] sm:$0xff]
    %v744 = vld [vmem:[%s8 + $0x30] sm:$0xff]
    %v745 = vld [vmem:[%s8 + $0x38] sm:$0xff]
    %v746 = vld [vmem:[%s8 + $0x40] sm:$0xff]
    %v747 = vld [vmem:[%s8 + $0x48] sm:$0xff]
    %v748 = vld [vmem:[%s8 + $0x50] sm:$0xff]
    %v749 = vld [vmem:[%s8 + $0x58] sm:$0xff]
    %v750 = vld [vmem:[%s8 + $0x60] sm:$0xff]
    %v751 = vld [vmem:[%s8 + $0x68] sm:$0xff]
    %v752 = vld [vmem:[%s8 + $0x70] sm:$0xff]
    %v753 = vld [vmem:[%s8 + $0x78] sm:$0xff]
    %v754 = vld [vmem:[%s8 + $0x80] sm:$0xff]
    %v755 = vld [vmem:[%s8 + $0x88] sm:$0xff]
    %v756 = vld [vmem:[%s8 + $0x90] sm:$0xff]
    %v757 = vld [vmem:[%s8 + $0x98] sm:$0xff]
    %v758 = vld [vmem:[%s8 + $0xa0] sm:$0xff]
    %v759 = vld [vmem:[%s8 + $0xa8] sm:$0xff]
    %v760 = vld [vmem:[%s8 + $0xb0] sm:$0xff]
    %v761 = vld [vmem:[%s8 + $0xb8] sm:$0xff]
    %v762 = vld [vmem:[%s8 + $0xc0] sm:$0xff]
    %v763 = vld [vmem:[%s8 + $0xc8] sm:$0xff]
    %v764 = vld [vmem:[%s8 + $0xd0] sm:$0xff]
    %v765 = vld [vmem:[%s8 + $0xd8] sm:$0xff]
    %v766 = vld [vmem:[%s8 + $0xe0] sm:$0xff]
    %v767 = vld [vmem:[%s8 + $0xe8] sm:$0xff]
    %v768 = vld [vmem:[%s8 + $0xf0] sm:$0xff]
    %v769 = vld [vmem:[%s8 + $0xf8] sm:$0xff]
    %v770 = vld [vmem:[%s8 + $0x100] sm:$0xff]
    %v771 = vld [vmem:[%s8 + $0x108] sm:$0xff]
    %v772 = vld [vmem:[%s8 + $0x110] sm:$0xff]
    %v773 = vld [vmem:[%s8 + $0x118] sm:$0xff]
    %v774 = vld [vmem:[%s8 + $0x120] sm:$0xff]
    %v775 = vld [vmem:[%s8 + $0x128] sm:$0xff]
    %v776 = vld [vmem:[%s8 + $0x130] sm:$0xff]
    %v777 = vld [vmem:[%s8 + $0x138] sm:$0xff]
    %v778 = vld [vmem:[%s8 + $0x140] sm:$0xff]
    %v779 = vld [vmem:[%s8 + $0x148] sm:$0xff]
    %v780 = vld [vmem:[%s8 + $0x150] sm:$0xff]
    %v781 = vld [vmem:[%s8 + $0x158] sm:$0xff]
    %v782 = vld [vmem:[%s8 + $0x160] sm:$0xff]
    %v783 = vld [vmem:[%s8 + $0x168] sm:$0xff]
    %v784 = vld [vmem:[%s8 + $0x170] sm:$0xff]
    %v785 = vld [vmem:[%s8 + $0x178] sm:$0xff]
    %v786 = vld [vmem:[%s8 + $0x180] sm:$0xff]
    %v787 = vld [vmem:[%s8 + $0x188] sm:$0xff]
    %v788 = vld [vmem:[%s8 + $0x190] sm:$0xff]
    %v789 = vld [vmem:[%s8 + $0x198] sm:$0xff]
    %v790 = vld [vmem:[%s8 + $0x1a0] sm:$0xff]
    %v791 = vld [vmem:[%s8 + $0x1a8] sm:$0xff]
    %v792 = vld [vmem:[%s8 + $0x1b0] sm:$0xff]
    %v793 = vld [vmem:[%s8 + $0x1b8] sm:$0xff]
    %v794 = vld [vmem:[%s8 + $0x1c0] sm:$0xff]
    %v795 = vld [vmem:[%s8 + $0x1c8] sm:$0xff]
    %v796 = vld [vmem:[%s8 + $0x1d0] sm:$0xff]
    %v797 = vld [vmem:[%s8 + $0x1d8] sm:$0xff]
    %v798 = vld [vmem:[%s8 + $0x1e0] sm:$0xff]
    %v799 = vld [vmem:[%s8 + $0x1e8] sm:$0xff]
    %v800 = vld [vmem:[%s8 + $0x1f0] sm:$0xff]
    %v801 = vld [vmem:[%s8 + $0x1f8] sm:$0xff]
    %802 = vmatpush.msra.mxu0 %v768
    %803 = vmatpush.msra.mxu0 %v766
    %804 = vmatpush.msra.mxu0 %v764
    %805 = vmatpush.msra.mxu0 %v762
    %806 = vmatpush.msra.mxu0 %v760
    %807 = vmatpush.msra.mxu0 %v758
    %808 = vmatpush.msra.mxu0 %v756
    %809 = vmatpush.msra.mxu0 %v754
    %810 = vmatpush.msra.mxu0 %v752
    %811 = vmatpush.msra.mxu0 %v750
    %812 = vmatpush.msra.mxu0 %v748
    %813 = vmatpush.msra.mxu0 %v746
    %814 = vmatpush.msra.mxu0 %v744
    %815 = vmatpush.msra.mxu0 %v742
    %816 = vmatpush.msra.mxu0 %v740
    %817 = vmatpush.msra.mxu0 %v738
    %818 = vmatmul.f32.gmra.mxu0 %v736
    %v819 = vpop.f32.mrf.mxu0
    %v820 = vadd.f32 %v507, %v819
    %821 = vdwg.mxu0
    %822 = vmatpush.msra.mxu0 %v800
    %823 = vmatpush.msra.mxu0 %v798
    %824 = vmatpush.msra.mxu0 %v796
    %825 = vmatpush.msra.mxu0 %v794
    %826 = vmatpush.msra.mxu0 %v792
    %827 = vmatpush.msra.mxu0 %v790
    %828 = vmatpush.msra.mxu0 %v788
    %829 = vmatpush.msra.mxu0 %v786
    %830 = vmatpush.msra.mxu0 %v784
    %831 = vmatpush.msra.mxu0 %v782
    %832 = vmatpush.msra.mxu0 %v780
    %833 = vmatpush.msra.mxu0 %v778
    %834 = vmatpush.msra.mxu0 %v776
    %835 = vmatpush.msra.mxu0 %v774
    %836 = vmatpush.msra.mxu0 %v772
    %837 = vmatpush.msra.mxu0 %v770
    %838 = vmatmul.f32.gmra.mxu0 %v737
    %v839 = vpop.f32.mrf.mxu0
    %v840 = vadd.f32 %v820, %v839
    %841 = vdwg.mxu0
    %842 = vmatpush.msra.mxu0 %v769
    %843 = vmatpush.msra.mxu0 %v767
    %844 = vmatpush.msra.mxu0 %v765
    %845 = vmatpush.msra.mxu0 %v763
    %846 = vmatpush.msra.mxu0 %v761
    %847 = vmatpush.msra.mxu0 %v759
    %848 = vmatpush.msra.mxu0 %v757
    %849 = vmatpush.msra.mxu0 %v755
    %850 = vmatpush.msra.mxu0 %v753
    %851 = vmatpush.msra.mxu0 %v751
    %852 = vmatpush.msra.mxu0 %v749
    %853 = vmatpush.msra.mxu0 %v747
    %854 = vmatpush.msra.mxu0 %v745
    %855 = vmatpush.msra.mxu0 %v743
    %856 = vmatpush.msra.mxu0 %v741
    %857 = vmatpush.msra.mxu0 %v739
    %858 = vmatmul.f32.gmra.mxu0 %v736
    %v859 = vpop.f32.mrf.mxu0
    %v860 = vadd.f32 %v508, %v859
    %861 = vdwg.mxu0
    %862 = vmatpush.msra.mxu0 %v801
    %863 = vmatpush.msra.mxu0 %v799
    %864 = vmatpush.msra.mxu0 %v797
    %865 = vmatpush.msra.mxu0 %v795
    %866 = vmatpush.msra.mxu0 %v793
    %867 = vmatpush.msra.mxu0 %v791
    %868 = vmatpush.msra.mxu0 %v789
    %869 = vmatpush.msra.mxu0 %v787
    %870 = vmatpush.msra.mxu0 %v785
    %871 = vmatpush.msra.mxu0 %v783
    %872 = vmatpush.msra.mxu0 %v781
    %873 = vmatpush.msra.mxu0 %v779
    %874 = vmatpush.msra.mxu0 %v777
    %875 = vmatpush.msra.mxu0 %v775
    %876 = vmatpush.msra.mxu0 %v773
    %877 = vmatpush.msra.mxu0 %v771
    %878 = vmatmul.f32.gmra.mxu0 %v737
    %v879 = vpop.f32.mrf.mxu0
    %v880 = vadd.f32 %v860, %v879
    %881 = vdwg.mxu0
    %882 = vst [vmem:[#allocation3 + $0x9] sm:$0x1] %v840
    %884 = vrot.lane.b32.xlu0 %v880, 96
    %v885 = vpop.permute.xlu0 %884
    %887 = vst.msk [vmem:[#allocation2 + $0x9] sm:$0x1] %vm596, %v885
    %v888 = vld [vmem:[#allocation2] sm:$0xff]
    %v889 = vld [vmem:[#allocation2 + $0x8] sm:$0xff]
    %v890 = vperm.slane %v880, 0
    %v891 = vmul.f32 %v888, %v890
    %v892 = vmul.f32 %v889, %v890
    %v893 = vsel %vm204, %v891, 0.0
    %894 = vadd.xlane.f32.xlu0 %v893
    %v895 = vpop.xlane.xlu0 %894
    %v896 = vsel %vm204, %v892, 0.0
    %897 = vadd.xlane.f32.xlu0 %v896
    %v898 = vpop.xlane.xlu0 %897
    %vm899 = vcmp.lt.s32.totalorder %v300, 10
    %vm900 = vcmp.lt.s32.totalorder %v301, 10
    %v901 = vsel %vm899, %v895, -1e+30
    %v902 = vsel %vm900, %v898, -1e+30
    %v903 = vmax.f32 %v901, %v902
    %v904 = vrot.slane %v903, 4
    %v905 = vmax.f32 %v903, %v904
    %v906 = vrot.slane %v905, 2
    %v907 = vmax.f32 %v905, %v906
    %v908 = vrot.slane %v907, 1
    %v909 = vmax.f32 %v907, %v908
    %v910 = vsub.f32 %v901, %v909
    %v911 = vsub.f32 %v902, %v909
    %v912 = vmul.f32 %v910, 1.442695
    %v913 = vpow.pop %v912
    %v914 = vmul.f32 %v911, 1.442695
    %v915 = vpow.pop %v914
    %v916 = vadd.f32 %v913, %v915
    %v917 = vrot.slane %v916, 4
    %v918 = vadd.f32 %v916, %v917
    %v919 = vrot.slane %v918, 2
    %v920 = vadd.f32 %v918, %v919
    %v921 = vrot.slane %v920, 1
    %v922 = vadd.f32 %v920, %v921
    %v923 = vrcp.pop %v922
    %v924 = vmul.f32 %v922, %v923
    %v925 = vsub.f32 1.0, %v924
    %v926 = vmul.f32 %v923, %v925
    %v927 = vadd.f32 %v923, %v926
    %vm928 = vweird.f32 %v922
    %vm929 = vweird.f32 %v923
    %vm930 = vmor %vm928, %vm929
    %v931 = vsel %vm930, %v923, %v927
    %v932 = vand.u32 2147483647, %v922
    %vm933 = vcmp.eq.f32.partialorder %v932, 8.507059e+37
    %v934 = vand.u32 %v922, 2147483648
    %v935 = vor.u32 1.1754944e-38, %v934
    %v936 = vsel %vm933, %v935, %v931
    %v937 = vmul.f32 %v913, %v936
    %v938 = vmul.f32 %v915, %v936
    %v939 = vld [vmem:[#allocation3] sm:$0xff]
    %v940 = vld [vmem:[#allocation3 + $0x8] sm:$0xff]
    %v941 = vmul.f32 %v937, %v939
    %v942 = vmul.f32 %v938, %v940
    %v943 = vadd.f32 %v941, %v942
    %v944 = vrot.slane %v943, 4
    %v945 = vadd.f32 %v943, %v944
    %v946 = vrot.slane %v945, 2
    %v947 = vadd.f32 %v945, %v946
    %v948 = vrot.slane %v947, 1
    %v949 = vadd.f32 %v947, %v948
    %v950 = vadd.f32 %v949, %v44
    %951 = vst [vmem:[#allocation4 + $0x2] sm:$0x1] %v950
    %v952 = vld [vmem:[%s1] sm:$0xff]
    %v953 = vld [vmem:[%s1 + $0x8] sm:$0xff]
    %v954 = vld [vmem:[%s1 + $0x10] sm:$0xff]
    %v955 = vld [vmem:[%s1 + $0x18] sm:$0xff]
    %v956 = vld [vmem:[%s1 + $0x20] sm:$0xff]
    %v957 = vld [vmem:[%s1 + $0x28] sm:$0xff]
    %v958 = vld [vmem:[%s1 + $0x30] sm:$0xff]
    %v959 = vld [vmem:[%s1 + $0x38] sm:$0xff]
    %v960 = vld [vmem:[%s1 + $0x40] sm:$0xff]
    %v961 = vld [vmem:[%s1 + $0x48] sm:$0xff]
    %v962 = vld [vmem:[%s1 + $0x50] sm:$0xff]
    %v963 = vld [vmem:[%s1 + $0x58] sm:$0xff]
    %v964 = vld [vmem:[%s1 + $0x60] sm:$0xff]
    %v965 = vld [vmem:[%s1 + $0x68] sm:$0xff]
    %v966 = vld [vmem:[%s1 + $0x70] sm:$0xff]
    %v967 = vld [vmem:[%s1 + $0x78] sm:$0xff]
    %v968 = vld [vmem:[%s1 + $0x80] sm:$0xff]
    %v969 = vld [vmem:[%s1 + $0x88] sm:$0xff]
    %v970 = vld [vmem:[%s1 + $0x90] sm:$0xff]
    %v971 = vld [vmem:[%s1 + $0x98] sm:$0xff]
    %v972 = vld [vmem:[%s1 + $0xa0] sm:$0xff]
    %v973 = vld [vmem:[%s1 + $0xa8] sm:$0xff]
    %v974 = vld [vmem:[%s1 + $0xb0] sm:$0xff]
    %v975 = vld [vmem:[%s1 + $0xb8] sm:$0xff]
    %v976 = vld [vmem:[%s1 + $0xc0] sm:$0xff]
    %v977 = vld [vmem:[%s1 + $0xc8] sm:$0xff]
    %v978 = vld [vmem:[%s1 + $0xd0] sm:$0xff]
    %v979 = vld [vmem:[%s1 + $0xd8] sm:$0xff]
    %v980 = vld [vmem:[%s1 + $0xe0] sm:$0xff]
    %v981 = vld [vmem:[%s1 + $0xe8] sm:$0xff]
    %v982 = vld [vmem:[%s1 + $0xf0] sm:$0xff]
    %v983 = vld [vmem:[%s1 + $0xf8] sm:$0xff]
    %984 = vmatpush.msra.mxu0 %v982
    %985 = vmatpush.msra.mxu0 %v980
    %986 = vmatpush.msra.mxu0 %v978
    %987 = vmatpush.msra.mxu0 %v976
    %988 = vmatpush.msra.mxu0 %v974
    %989 = vmatpush.msra.mxu0 %v972
    %990 = vmatpush.msra.mxu0 %v970
    %991 = vmatpush.msra.mxu0 %v968
    %992 = vmatpush.msra.mxu0 %v966
    %993 = vmatpush.msra.mxu0 %v964
    %994 = vmatpush.msra.mxu0 %v962
    %995 = vmatpush.msra.mxu0 %v960
    %996 = vmatpush.msra.mxu0 %v958
    %997 = vmatpush.msra.mxu0 %v956
    %998 = vmatpush.msra.mxu0 %v954
    %999 = vmatpush.msra.mxu0 %v952
    %1000 = vmatmul.f32.gmra.mxu0 %v950
    %v1001 = vpop.f32.mrf.mxu0
    %v1002 = vadd.f32 %v81, %v1001
    %1003 = vdwg.mxu0
    %1004 = vmatpush.msra.mxu0 %v983
    %1005 = vmatpush.msra.mxu0 %v981
    %1006 = vmatpush.msra.mxu0 %v979
    %1007 = vmatpush.msra.mxu0 %v977
    %1008 = vmatpush.msra.mxu0 %v975
    %1009 = vmatpush.msra.mxu0 %v973
    %1010 = vmatpush.msra.mxu0 %v971
    %1011 = vmatpush.msra.mxu0 %v969
    %1012 = vmatpush.msra.mxu0 %v967
    %1013 = vmatpush.msra.mxu0 %v965
    %1014 = vmatpush.msra.mxu0 %v963
    %1015 = vmatpush.msra.mxu0 %v961
    %1016 = vmatpush.msra.mxu0 %v959
    %1017 = vmatpush.msra.mxu0 %v957
    %1018 = vmatpush.msra.mxu0 %v955
    %1019 = vmatpush.msra.mxu0 %v953
    %1020 = vmatmul.f32.gmra.mxu0 %v950
    %v1021 = vpop.f32.mrf.mxu0
    %v1022 = vadd.f32 %v82, %v1021
    %1023 = vdwg.mxu0
    %v1024 = vmul.f32 %v1002, 0.01
    %v1025 = vmul.f32 %v1022, 0.01
    %v1026 = vmax.f32 %v1002, %v1024
    %v1027 = vmax.f32 %v1022, %v1025
    %v1028 = vld [vmem:[%s8] sm:$0xff]
    %v1029 = vld [vmem:[%s8 + $0x8] sm:$0xff]
    %v1030 = vld [vmem:[%s8 + $0x10] sm:$0xff]
    %v1031 = vld [vmem:[%s8 + $0x18] sm:$0xff]
    %v1032 = vld [vmem:[%s8 + $0x20] sm:$0xff]
    %v1033 = vld [vmem:[%s8 + $0x28] sm:$0xff]
    %v1034 = vld [vmem:[%s8 + $0x30] sm:$0xff]
    %v1035 = vld [vmem:[%s8 + $0x38] sm:$0xff]
    %v1036 = vld [vmem:[%s8 + $0x40] sm:$0xff]
    %v1037 = vld [vmem:[%s8 + $0x48] sm:$0xff]
    %v1038 = vld [vmem:[%s8 + $0x50] sm:$0xff]
    %v1039 = vld [vmem:[%s8 + $0x58] sm:$0xff]
    %v1040 = vld [vmem:[%s8 + $0x60] sm:$0xff]
    %v1041 = vld [vmem:[%s8 + $0x68] sm:$0xff]
    %v1042 = vld [vmem:[%s8 + $0x70] sm:$0xff]
    %v1043 = vld [vmem:[%s8 + $0x78] sm:$0xff]
    %v1044 = vld [vmem:[%s8 + $0x80] sm:$0xff]
    %v1045 = vld [vmem:[%s8 + $0x88] sm:$0xff]
    %v1046 = vld [vmem:[%s8 + $0x90] sm:$0xff]
    %v1047 = vld [vmem:[%s8 + $0x98] sm:$0xff]
    %v1048 = vld [vmem:[%s8 + $0xa0] sm:$0xff]
    %v1049 = vld [vmem:[%s8 + $0xa8] sm:$0xff]
    %v1050 = vld [vmem:[%s8 + $0xb0] sm:$0xff]
    %v1051 = vld [vmem:[%s8 + $0xb8] sm:$0xff]
    %v1052 = vld [vmem:[%s8 + $0xc0] sm:$0xff]
    %v1053 = vld [vmem:[%s8 + $0xc8] sm:$0xff]
    %v1054 = vld [vmem:[%s8 + $0xd0] sm:$0xff]
    %v1055 = vld [vmem:[%s8 + $0xd8] sm:$0xff]
    %v1056 = vld [vmem:[%s8 + $0xe0] sm:$0xff]
    %v1057 = vld [vmem:[%s8 + $0xe8] sm:$0xff]
    %v1058 = vld [vmem:[%s8 + $0xf0] sm:$0xff]
    %v1059 = vld [vmem:[%s8 + $0xf8] sm:$0xff]
    %v1060 = vld [vmem:[%s8 + $0x100] sm:$0xff]
    %v1061 = vld [vmem:[%s8 + $0x108] sm:$0xff]
    %v1062 = vld [vmem:[%s8 + $0x110] sm:$0xff]
    %v1063 = vld [vmem:[%s8 + $0x118] sm:$0xff]
    %v1064 = vld [vmem:[%s8 + $0x120] sm:$0xff]
    %v1065 = vld [vmem:[%s8 + $0x128] sm:$0xff]
    %v1066 = vld [vmem:[%s8 + $0x130] sm:$0xff]
    %v1067 = vld [vmem:[%s8 + $0x138] sm:$0xff]
    %v1068 = vld [vmem:[%s8 + $0x140] sm:$0xff]
    %v1069 = vld [vmem:[%s8 + $0x148] sm:$0xff]
    %v1070 = vld [vmem:[%s8 + $0x150] sm:$0xff]
    %v1071 = vld [vmem:[%s8 + $0x158] sm:$0xff]
    %v1072 = vld [vmem:[%s8 + $0x160] sm:$0xff]
    %v1073 = vld [vmem:[%s8 + $0x168] sm:$0xff]
    %v1074 = vld [vmem:[%s8 + $0x170] sm:$0xff]
    %v1075 = vld [vmem:[%s8 + $0x178] sm:$0xff]
    %v1076 = vld [vmem:[%s8 + $0x180] sm:$0xff]
    %v1077 = vld [vmem:[%s8 + $0x188] sm:$0xff]
    %v1078 = vld [vmem:[%s8 + $0x190] sm:$0xff]
    %v1079 = vld [vmem:[%s8 + $0x198] sm:$0xff]
    %v1080 = vld [vmem:[%s8 + $0x1a0] sm:$0xff]
    %v1081 = vld [vmem:[%s8 + $0x1a8] sm:$0xff]
    %v1082 = vld [vmem:[%s8 + $0x1b0] sm:$0xff]
    %v1083 = vld [vmem:[%s8 + $0x1b8] sm:$0xff]
    %v1084 = vld [vmem:[%s8 + $0x1c0] sm:$0xff]
    %v1085 = vld [vmem:[%s8 + $0x1c8] sm:$0xff]
    %v1086 = vld [vmem:[%s8 + $0x1d0] sm:$0xff]
    %v1087 = vld [vmem:[%s8 + $0x1d8] sm:$0xff]
    %v1088 = vld [vmem:[%s8 + $0x1e0] sm:$0xff]
    %v1089 = vld [vmem:[%s8 + $0x1e8] sm:$0xff]
    %v1090 = vld [vmem:[%s8 + $0x1f0] sm:$0xff]
    %v1091 = vld [vmem:[%s8 + $0x1f8] sm:$0xff]
    %1092 = vmatpush.msra.mxu0 %v1058
    %1093 = vmatpush.msra.mxu0 %v1056
    %1094 = vmatpush.msra.mxu0 %v1054
    %1095 = vmatpush.msra.mxu0 %v1052
    %1096 = vmatpush.msra.mxu0 %v1050
    %1097 = vmatpush.msra.mxu0 %v1048
    %1098 = vmatpush.msra.mxu0 %v1046
    %1099 = vmatpush.msra.mxu0 %v1044
    %1100 = vmatpush.msra.mxu0 %v1042
    %1101 = vmatpush.msra.mxu0 %v1040
    %1102 = vmatpush.msra.mxu0 %v1038
    %1103 = vmatpush.msra.mxu0 %v1036
    %1104 = vmatpush.msra.mxu0 %v1034
    %1105 = vmatpush.msra.mxu0 %v1032
    %1106 = vmatpush.msra.mxu0 %v1030
    %1107 = vmatpush.msra.mxu0 %v1028
    %1108 = vmatmul.f32.gmra.mxu0 %v1026
    %v1109 = vpop.f32.mrf.mxu0
    %v1110 = vadd.f32 %v507, %v1109
    %1111 = vdwg.mxu0
    %1112 = vmatpush.msra.mxu0 %v1090
    %1113 = vmatpush.msra.mxu0 %v1088
    %1114 = vmatpush.msra.mxu0 %v1086
    %1115 = vmatpush.msra.mxu0 %v1084
    %1116 = vmatpush.msra.mxu0 %v1082
    %1117 = vmatpush.msra.mxu0 %v1080
    %1118 = vmatpush.msra.mxu0 %v1078
    %1119 = vmatpush.msra.mxu0 %v1076
    %1120 = vmatpush.msra.mxu0 %v1074
    %1121 = vmatpush.msra.mxu0 %v1072
    %1122 = vmatpush.msra.mxu0 %v1070
    %1123 = vmatpush.msra.mxu0 %v1068
    %1124 = vmatpush.msra.mxu0 %v1066
    %1125 = vmatpush.msra.mxu0 %v1064
    %1126 = vmatpush.msra.mxu0 %v1062
    %1127 = vmatpush.msra.mxu0 %v1060
    %1128 = vmatmul.f32.gmra.mxu0 %v1027
    %v1129 = vpop.f32.mrf.mxu0
    %v1130 = vadd.f32 %v1110, %v1129
    %1131 = vdwg.mxu0
    %1132 = vmatpush.msra.mxu0 %v1059
    %1133 = vmatpush.msra.mxu0 %v1057
    %1134 = vmatpush.msra.mxu0 %v1055
    %1135 = vmatpush.msra.mxu0 %v1053
    %1136 = vmatpush.msra.mxu0 %v1051
    %1137 = vmatpush.msra.mxu0 %v1049
    %1138 = vmatpush.msra.mxu0 %v1047
    %1139 = vmatpush.msra.mxu0 %v1045
    %1140 = vmatpush.msra.mxu0 %v1043
    %1141 = vmatpush.msra.mxu0 %v1041
    %1142 = vmatpush.msra.mxu0 %v1039
    %1143 = vmatpush.msra.mxu0 %v1037
    %1144 = vmatpush.msra.mxu0 %v1035
    %1145 = vmatpush.msra.mxu0 %v1033
    %1146 = vmatpush.msra.mxu0 %v1031
    %1147 = vmatpush.msra.mxu0 %v1029
    %1148 = vmatmul.f32.gmra.mxu0 %v1026
    %v1149 = vpop.f32.mrf.mxu0
    %v1150 = vadd.f32 %v508, %v1149
    %1151 = vdwg.mxu0
    %1152 = vmatpush.msra.mxu0 %v1091
    %1153 = vmatpush.msra.mxu0 %v1089
    %1154 = vmatpush.msra.mxu0 %v1087
    %1155 = vmatpush.msra.mxu0 %v1085
    %1156 = vmatpush.msra.mxu0 %v1083
    %1157 = vmatpush.msra.mxu0 %v1081
    %1158 = vmatpush.msra.mxu0 %v1079
    %1159 = vmatpush.msra.mxu0 %v1077
    %1160 = vmatpush.msra.mxu0 %v1075
    %1161 = vmatpush.msra.mxu0 %v1073
    %1162 = vmatpush.msra.mxu0 %v1071
    %1163 = vmatpush.msra.mxu0 %v1069
    %1164 = vmatpush.msra.mxu0 %v1067
    %1165 = vmatpush.msra.mxu0 %v1065
    %1166 = vmatpush.msra.mxu0 %v1063
    %1167 = vmatpush.msra.mxu0 %v1061
    %1168 = vmatmul.f32.gmra.mxu0 %v1027
    %v1169 = vpop.f32.mrf.mxu0
    %v1170 = vadd.f32 %v1150, %v1169
    %1171 = vdwg.mxu0
    %1172 = vst [vmem:[#allocation3 + $0xa] sm:$0x1] %v1130
    %1174 = vrot.lane.b32.xlu0 %v1170, 96
    %v1175 = vpop.permute.xlu0 %1174
    %1177 = vst.msk [vmem:[#allocation2 + $0xa] sm:$0x1] %vm596, %v1175
    %v1178 = vld [vmem:[#allocation2] sm:$0xff]
    %v1179 = vld [vmem:[#allocation2 + $0x8] sm:$0xff]
    %v1180 = vperm.slane %v1170, 0
    %v1181 = vmul.f32 %v1178, %v1180
    %v1182 = vmul.f32 %v1179, %v1180
    %v1183 = vsel %vm204, %v1181, 0.0
    %1184 = vadd.xlane.f32.xlu0 %v1183
    %v1185 = vpop.xlane.xlu0 %1184
    %v1186 = vsel %vm204, %v1182, 0.0
    %1187 = vadd.xlane.f32.xlu0 %v1186
    %v1188 = vpop.xlane.xlu0 %1187
    %vm1189 = vcmp.lt.s32.totalorder %v300, 11
    %vm1190 = vcmp.lt.s32.totalorder %v301, 11
    %v1191 = vsel %vm1189, %v1185, -1e+30
    %v1192 = vsel %vm1190, %v1188, -1e+30
    %v1193 = vmax.f32 %v1191, %v1192
    %v1194 = vrot.slane %v1193, 4
    %v1195 = vmax.f32 %v1193, %v1194
    %v1196 = vrot.slane %v1195, 2
    %v1197 = vmax.f32 %v1195, %v1196
    %v1198 = vrot.slane %v1197, 1
    %v1199 = vmax.f32 %v1197, %v1198
    %v1200 = vsub.f32 %v1191, %v1199
    %v1201 = vsub.f32 %v1192, %v1199
    %v1202 = vmul.f32 %v1200, 1.442695
    %v1203 = vpow.pop %v1202
    %v1204 = vmul.f32 %v1201, 1.442695
    %v1205 = vpow.pop %v1204
    %v1206 = vadd.f32 %v1203, %v1205
    %v1207 = vrot.slane %v1206, 4
    %v1208 = vadd.f32 %v1206, %v1207
    %v1209 = vrot.slane %v1208, 2
    %v1210 = vadd.f32 %v1208, %v1209
    %v1211 = vrot.slane %v1210, 1
    %v1212 = vadd.f32 %v1210, %v1211
    %v1213 = vrcp.pop %v1212
    %v1214 = vmul.f32 %v1212, %v1213
    %v1215 = vsub.f32 1.0, %v1214
    %v1216 = vmul.f32 %v1213, %v1215
    %v1217 = vadd.f32 %v1213, %v1216
    %vm1218 = vweird.f32 %v1212
    %vm1219 = vweird.f32 %v1213
    %vm1220 = vmor %vm1218, %vm1219
    %v1221 = vsel %vm1220, %v1213, %v1217
    %v1222 = vand.u32 2147483647, %v1212
    %vm1223 = vcmp.eq.f32.partialorder %v1222, 8.507059e+37
    %v1224 = vand.u32 %v1212, 2147483648
    %v1225 = vor.u32 1.1754944e-38, %v1224
    %v1226 = vsel %vm1223, %v1225, %v1221
    %v1227 = vmul.f32 %v1203, %v1226
    %v1228 = vmul.f32 %v1205, %v1226
    %v1229 = vld [vmem:[#allocation3] sm:$0xff]
    %v1230 = vld [vmem:[#allocation3 + $0x8] sm:$0xff]
    %v1231 = vmul.f32 %v1227, %v1229
    %v1232 = vmul.f32 %v1228, %v1230
    %v1233 = vadd.f32 %v1231, %v1232
    %v1234 = vrot.slane %v1233, 4
    %v1235 = vadd.f32 %v1233, %v1234
    %v1236 = vrot.slane %v1235, 2
    %v1237 = vadd.f32 %v1235, %v1236
    %v1238 = vrot.slane %v1237, 1
    %v1239 = vadd.f32 %v1237, %v1238
    %v1240 = vadd.f32 %v1239, %v44
    %1241 = vst [vmem:[#allocation4 + $0x3] sm:$0x1] %v1240
    // Predicated region
    $region46: #{tpu_custom_call.1} parent=1 // pred_check
      _
    $region47: #{tpu_custom_call.1} parent=1 // pred_check_branch
      %1243 = sbr.rel (0) target = $region49
    $region48: #{tpu_custom_call.1} parent=1 // pred_region
      %1245 = vsyncadd [#allocation5], 0
      %s1247 = sshll.u32 [#allocation4], 4
      %s1248 = int_to_ptr.vmem [resolvable:$true] %s1247
      %s1249 = sshll.u32 %s11, 4
      %s1250 = int_to_ptr.hbm [resolvable:$true] %s1249
      %1252 = dma.vmem_to_hbm [thread:$0]  %s1248, 128, %s1250, [#allocation5]
    $region49: #{tpu_custom_call.1} parent=1 // pred_fallthru
      _
    // Predicated region
    $region50: #{tpu_custom_call.1} parent=1 // pred_check
      _
    $region51: #{tpu_custom_call.1} parent=1 // pred_check_branch
      %1254 = sbr.rel (0) target = $region53
    $region52: #{tpu_custom_call.1} parent=1 // pred_region
      %1256 = dma.done [#allocation5], 128
    $region53: #{tpu_custom_call.1} parent=1 // pred_fallthru
      _
    %1257 = vsyncpa [#allocation5], 1

</llo_original>
